<compile_context>
chip_gen: v7x
topology: tpu7x:2x2x1
jax: 0.10.0
libtpu: 0.0.40
codegen_flags: <defaults>
</compile_context>

<pallas_src>
import jax
import jax.numpy as jnp
from jax.experimental import pallas as pl
from jax.experimental.pallas import tpu as pltpu

HIDDEN = 32   # hidden_size (small test shape; PyTorch script uses 256)
VOCAB = 16    # output_size

_LANE = 128
_NEG = -1e30


def _round_up(x, m):
    return (x + m - 1) // m * m


def decoder_rnn_kernel(tok_ref,     # SMEM (1,) int32 prefetched token (consumed by the emb index_map)
                       h0_ref,      # VMEM (1, Hp)    f32   initial hidden (zero-padded)
                       emb_ref,     # VMEM (1, 1, Hp) bf16  selected embedding row only
                       w_cat_ref,   # VMEM (Hp, 6Hp)  bf16  [W_ih^T | W_hh^T], gate blocks Hp lanes wide
                       b_rz_ref,    # VMEM (1, 2Hp)   f32   (b_ih + b_hh) for the r,z gates
                       b_ihn_ref,   # VMEM (1, Hp)    f32   b_ih for the n gate
                       b_hhn_ref,   # VMEM (1, Hp)    f32   b_hh for the n gate
                       w_out_ref,   # VMEM (Hp, Vp)   bf16  output Linear weight (transposed, padded)
                       b_out_ref,   # VMEM (1, Vp)    f32   output bias (-1e30 in padded vocab lanes)
                       out_ref,     # VMEM (1, Vp)    f32   log-softmax output
                       hid_ref):    # VMEM (1, Hp)    f32   final hidden
    Hp = h0_ref.shape[1]

    # output = F.relu(self.embedding(input).view(1, 1, -1))
    x = jnp.maximum(emb_ref[0], 0)            # (1, Hp) bf16; padded lanes stay 0
    h = h0_ref[...]                           # (1, Hp) f32

    w_cat = w_cat_ref[...]
    b_rz = b_rz_ref[...]
    b_ihn = b_ihn_ref[...]
    b_hhn = b_hhn_ref[...]

    def gru_step(gi, gh, h_prev):
        # r/z share one fused bias add; all gate slices are 128-lane aligned (Hp-wide blocks).
        rz = jax.nn.sigmoid(gi[:, :2 * Hp] + gh[:, :2 * Hp] + b_rz)
        r = rz[:, :Hp]
        z = rz[:, Hp:]
        n = jnp.tanh(gi[:, 2 * Hp:] + b_ihn + r * (gh[:, 2 * Hp:] + b_hhn))
        return (1.0 - z) * n + z * h_prev

    # Step 1: GRU input (relu'd embedding) != hidden -> two matmuls on the fused weight halves.
    gi0 = jnp.dot(x, w_cat[:, :3 * Hp], preferred_element_type=jnp.float32)
    gh0 = jnp.dot(h.astype(jnp.bfloat16), w_cat[:, 3 * Hp:],
                  preferred_element_type=jnp.float32)
    h = gru_step(gi0, gh0, h)

    # Steps 2..5: GRU input == hidden -> one fused (1,Hp)@(Hp,6Hp) matmul per step.
    for _ in range(4):
        g = jnp.dot(h.astype(jnp.bfloat16), w_cat, preferred_element_type=jnp.float32)
        h = gru_step(g[:, :3 * Hp], g[:, 3 * Hp:], h)

    # output = self.softmax(self.out(output[0]))   (LogSoftmax over dim=1)
    logits = jnp.dot(h.astype(jnp.bfloat16), w_out_ref[...],
                     preferred_element_type=jnp.float32) + b_out_ref[...]
    m = jnp.max(logits, axis=1, keepdims=True)
    lse = m + jnp.log(jnp.sum(jnp.exp(logits - m), axis=1, keepdims=True))
    out_ref[...] = logits - lse
    hid_ref[...] = h


def _pack_gru_weight(w, H, Hp):
    """PyTorch (3H, H) gate-stacked GRU weight -> (Hp, 3*Hp) `x @ W` layout, Hp-wide gate blocks."""
    wg = w.reshape(3, H, H)                 # (gate, out, in)
    wg = jnp.transpose(wg, (2, 0, 1))       # (in, gate, out)
    wg = jnp.pad(wg, ((0, Hp - H), (0, 0), (0, Hp - H)))
    return wg.reshape(Hp, 3 * Hp)


def _pack_gate_bias(b, H, Hp, g0, g1):
    bg = b.reshape(3, H)[g0:g1]
    bg = jnp.pad(bg, ((0, 0), (0, Hp - H)))
    return bg.reshape(1, (g1 - g0) * Hp)


@jax.jit
def decoder_rnn_forward(token, hidden, params):
    emb = params["embedding"]
    V, H = emb.shape
    Hp = _round_up(H, _LANE)
    Vp = _round_up(V, _LANE)

    # --- wrapper-side packing: bf16 matmul operands, f32 biases, 128-lane dense layouts ---
    emb_p = jnp.pad(emb, ((0, 0), (0, Hp - H))).astype(jnp.bfloat16).reshape(V, 1, Hp)

    w_cat = jnp.concatenate(
        [_pack_gru_weight(params["w_ih"], H, Hp),
         _pack_gru_weight(params["w_hh"], H, Hp)], axis=1).astype(jnp.bfloat16)

    b_rz = _pack_gate_bias(params["b_ih"] + params["b_hh"], H, Hp, 0, 2).astype(jnp.float32)
    b_ihn = _pack_gate_bias(params["b_ih"], H, Hp, 2, 3).astype(jnp.float32)
    b_hhn = _pack_gate_bias(params["b_hh"], H, Hp, 2, 3).astype(jnp.float32)

    w_out_p = jnp.pad(params["w_out"].T, ((0, Hp - H), (0, Vp - V))).astype(jnp.bfloat16)
    b_out_p = jnp.pad(params["b_out"].reshape(1, V), ((0, 0), (0, Vp - V)),
                      constant_values=_NEG).astype(jnp.float32)

    h0_p = jnp.pad(hidden.reshape(1, H).astype(jnp.float32), ((0, 0), (0, Hp - H)))
    token = token.reshape(1).astype(jnp.int32)

    # per-invocation VMEM block footprint (x2 for double-buffering) -> explicit limit
    block_bytes = (Hp * 4 + Hp * 2 + Hp * 6 * Hp * 2 + 2 * Hp * 4 + 2 * Hp * 4
                   + Hp * Vp * 2 + Vp * 4 + Vp * 4 + Hp * 4)
    vmem_limit = int(max(4 << 20, 2 * block_bytes + (2 << 20)))

    grid_spec = pltpu.PrefetchScalarGridSpec(
        num_scalar_prefetch=1,
        grid=(1,),
        in_specs=[
            pl.BlockSpec((1, Hp), lambda i, tok: (0, 0)),             # h0
            pl.BlockSpec((1, 1, Hp), lambda i, tok: (tok[0], 0, 0)),  # selected embedding row only
            pl.BlockSpec((Hp, 6 * Hp), lambda i, tok: (0, 0)),        # fused GRU weight
            pl.BlockSpec((1, 2 * Hp), lambda i, tok: (0, 0)),         # b_rz
            pl.BlockSpec((1, Hp), lambda i, tok: (0, 0)),             # b_ih (n gate)
            pl.BlockSpec((1, Hp), lambda i, tok: (0, 0)),             # b_hh (n gate)
            pl.BlockSpec((Hp, Vp), lambda i, tok: (0, 0)),            # w_out^T
            pl.BlockSpec((1, Vp), lambda i, tok: (0, 0)),             # b_out
        ],
        out_specs=(
            pl.BlockSpec((1, Vp), lambda i, tok: (0, 0)),
            pl.BlockSpec((1, Hp), lambda i, tok: (0, 0)),
        ),
    )

    out_p, h_p = pl.pallas_call(
        decoder_rnn_kernel,
        grid_spec=grid_spec,
        out_shape=(jax.ShapeDtypeStruct((1, Vp), jnp.float32),
                   jax.ShapeDtypeStruct((1, Hp), jnp.float32)),
        compiler_params=pltpu.CompilerParams(
            dimension_semantics=("arbitrary",),
            vmem_limit_bytes=vmem_limit),
    )(token, h0_p, emb_p, w_cat, b_rz, b_ihn, b_hhn, w_out_p, b_out_p)

    # TODO(synk): at real vocab sizes (V ~ 30k, v7x 64 MiB VMEM) stream w_out over a
    # 'parallel' V-tile grid axis (raw logits + lse outputs) instead of one resident tile.
    return out_p[:, :V], h_p[:, :H].reshape(1, 1, H)


def reference_forward(token, hidden, params, weight_dtype=jnp.float32):
    """Pure-JAX reference mirroring the PyTorch forward (optionally with bf16 weights)."""
    emb = params["embedding"].astype(weight_dtype)
    H = params["embedding"].shape[1]
    w_ih = params["w_ih"].astype(weight_dtype)
    w_hh = params["w_hh"].astype(weight_dtype)
    w_out = params["w_out"].astype(weight_dtype)
    b_ih, b_hh, b_out = params["b_ih"], params["b_hh"], params["b_out"]

    x = jnp.maximum(emb[token[0]], 0).reshape(1, H)
    h = hidden.reshape(1, H).astype(jnp.float32)
    for _ in range(5):
        gi = jnp.dot(x.astype(weight_dtype), w_ih.T, preferred_element_type=jnp.float32) + b_ih
        gh = jnp.dot(h.astype(weight_dtype), w_hh.T, preferred_element_type=jnp.float32) + b_hh
        r = jax.nn.sigmoid(gi[:, :H] + gh[:, :H])
        z = jax.nn.sigmoid(gi[:, H:2 * H] + gh[:, H:2 * H])
        n = jnp.tanh(gi[:, 2 * H:] + r * gh[:, 2 * H:])
        h = (1.0 - z) * n + z * h
        x = h
    logits = jnp.dot(h.astype(weight_dtype), w_out.T, preferred_element_type=jnp.float32) + b_out
    out = jax.nn.log_softmax(logits, axis=1)
    return out, h.reshape(1, 1, H)


def init_params(key, hidden_size, output_size):
    ks = jax.random.split(key, 7)
    s = 1.0 / jnp.sqrt(hidden_size)
    return {
        "embedding": jax.random.normal(ks[0], (output_size, hidden_size), jnp.float32),
        "w_ih": jax.random.uniform(ks[1], (3 * hidden_size, hidden_size), jnp.float32, -s, s),
        "w_hh": jax.random.uniform(ks[2], (3 * hidden_size, hidden_size), jnp.float32, -s, s),
        "b_ih": jax.random.uniform(ks[3], (3 * hidden_size,), jnp.float32, -s, s),
        "b_hh": jax.random.uniform(ks[4], (3 * hidden_size,), jnp.float32, -s, s),
        "w_out": jax.random.uniform(ks[5], (output_size, hidden_size), jnp.float32, -s, s),
        "b_out": jax.random.uniform(ks[6], (output_size,), jnp.float32, -s, s),
    }


if __name__ == "__main__":
    key = jax.random.PRNGKey(0)
    params = init_params(key, HIDDEN, VOCAB)

    token = jnp.array([3], dtype=jnp.int32)                 # decoder input token
    hidden = jnp.zeros((1, 1, HIDDEN), dtype=jnp.float32)   # initHidden()

    out, new_hidden = decoder_rnn_forward(token, hidden, params)
    jax.block_until_ready((out, new_hidden))

    assert out.shape == (1, VOCAB) and new_hidden.shape == (1, 1, HIDDEN)

    # Tight check against a reference using the same bf16 weight quantization.
    ref_out_bf, ref_h_bf = reference_forward(token, hidden, params, weight_dtype=jnp.bfloat16)
    assert jnp.allclose(out, ref_out_bf, atol=1e-3, rtol=1e-3)
    assert jnp.allclose(new_hidden, ref_h_bf, atol=1e-3, rtol=1e-3)

    # Loose check against the pure-f32 PyTorch-equivalent math (bf16 weight quantization error only).
    ref_out_f32, ref_h_f32 = reference_forward(token, hidden, params, weight_dtype=jnp.float32)
    assert jnp.allclose(out, ref_out_f32, atol=5e-2, rtol=5e-2)
    assert jnp.allclose(new_hidden, ref_h_f32, atol=5e-2, rtol=5e-2)

    print("KERNEL_OK")
</pallas_src>

<mosaic_0001>
module attributes {stable_mosaic.version = 11 : i64} {
  func.func @decoder_rnn_kernel(%arg0: i32, %arg1: memref<1xi32, #tpu.memory_space<smem>>, %arg2: memref<1x128xf32, #tpu.memory_space<vmem>>, %arg3: memref<1x1x128xbf16, #tpu.memory_space<vmem>>, %arg4: memref<128x768xbf16, #tpu.memory_space<vmem>>, %arg5: memref<1x256xf32, #tpu.memory_space<vmem>>, %arg6: memref<1x128xf32, #tpu.memory_space<vmem>>, %arg7: memref<1x128xf32, #tpu.memory_space<vmem>>, %arg8: memref<128x128xbf16, #tpu.memory_space<vmem>>, %arg9: memref<1x128xf32, #tpu.memory_space<vmem>>, %arg10: memref<1x128xf32, #tpu.memory_space<vmem>>, %arg11: memref<1x128xf32, #tpu.memory_space<vmem>>) attributes {dimension_semantics = [#tpu.dimension_semantics<arbitrary>], iteration_bounds = array<i64: 1>, scalar_prefetch = 1 : i64, scratch_operands = 0 : i64, tpu.core_type = #tpu.core_type<tc>, window_params = [{pipeline_mode = #tpu.pipeline_mode<synchronous>, transform_indices = @transform_0, window_bounds = array<i64: 1, 128>}, {transform_indices = @transform_1, window_bounds = array<i64: 1, 1, 128>}, {pipeline_mode = #tpu.pipeline_mode<synchronous>, transform_indices = @transform_2, window_bounds = array<i64: 128, 768>}, {pipeline_mode = #tpu.pipeline_mode<synchronous>, transform_indices = @transform_3, window_bounds = array<i64: 1, 256>}, {pipeline_mode = #tpu.pipeline_mode<synchronous>, transform_indices = @transform_4, window_bounds = array<i64: 1, 128>}, {pipeline_mode = #tpu.pipeline_mode<synchronous>, transform_indices = @transform_5, window_bounds = array<i64: 1, 128>}, {pipeline_mode = #tpu.pipeline_mode<synchronous>, transform_indices = @transform_6, window_bounds = array<i64: 128, 128>}, {pipeline_mode = #tpu.pipeline_mode<synchronous>, transform_indices = @transform_7, window_bounds = array<i64: 1, 128>}, {pipeline_mode = #tpu.pipeline_mode<synchronous>, transform_indices = @transform_8, window_bounds = array<i64: 1, 128>}, {pipeline_mode = #tpu.pipeline_mode<synchronous>, transform_indices = @transform_9, window_bounds = array<i64: 1, 128>}]} {
    %c0 = arith.constant 0 : index
    %c0_0 = arith.constant 0 : index
    %c0_1 = arith.constant 0 : index
    %0 = vector.load %arg3[%c0, %c0_0, %c0_1] : memref<1x1x128xbf16, #tpu.memory_space<vmem>>, vector<1x1x128xbf16>
    %1 = vector.shape_cast %0 : vector<1x1x128xbf16> to vector<1x128xbf16>
    %cst = arith.constant 0.000000e+00 : bf16
    %2 = vector.broadcast %cst : bf16 to vector<1x128xbf16>
    %3 = arith.maximumf %1, %2 : vector<1x128xbf16>
    %c0_2 = arith.constant 0 : index
    %c0_3 = arith.constant 0 : index
    %4 = vector.load %arg2[%c0_2, %c0_3] : memref<1x128xf32, #tpu.memory_space<vmem>>, vector<1x128xf32>
    %c0_4 = arith.constant 0 : index
    %c0_5 = arith.constant 0 : index
    %5 = vector.load %arg4[%c0_4, %c0_5] : memref<128x768xbf16, #tpu.memory_space<vmem>>, vector<128x768xbf16>
    %c0_6 = arith.constant 0 : index
    %c0_7 = arith.constant 0 : index
    %6 = vector.load %arg5[%c0_6, %c0_7] : memref<1x256xf32, #tpu.memory_space<vmem>>, vector<1x256xf32>
    %c0_8 = arith.constant 0 : index
    %c0_9 = arith.constant 0 : index
    %7 = vector.load %arg6[%c0_8, %c0_9] : memref<1x128xf32, #tpu.memory_space<vmem>>, vector<1x128xf32>
    %c0_10 = arith.constant 0 : index
    %c0_11 = arith.constant 0 : index
    %8 = vector.load %arg7[%c0_10, %c0_11] : memref<1x128xf32, #tpu.memory_space<vmem>>, vector<1x128xf32>
    %9 = vector.extract_strided_slice %5 {offsets = [0, 0], sizes = [128, 384], strides = [1, 1]} : vector<128x768xbf16> to vector<128x384xbf16>
    %cst_12 = arith.constant dense<0.000000e+00> : vector<1x384xf32>
    %10 = tpu.matmul %3, %9, %cst_12 {dimension_numbers = #tpu.dot_dimension_numbers<[1], [0], [0], [1], [0, 0, 1, 1], [], []>} : vector<1x128xbf16>, vector<128x384xbf16>, vector<1x384xf32> -> vector<1x384xf32>
    %11 = arith.truncf %4 : vector<1x128xf32> to vector<1x128xbf16>
    %12 = vector.extract_strided_slice %5 {offsets = [0, 384], sizes = [128, 384], strides = [1, 1]} : vector<128x768xbf16> to vector<128x384xbf16>
    %cst_13 = arith.constant dense<0.000000e+00> : vector<1x384xf32>
    %13 = tpu.matmul %11, %12, %cst_13 {dimension_numbers = #tpu.dot_dimension_numbers<[1], [0], [0], [1], [0, 0, 1, 1], [], []>} : vector<1x128xbf16>, vector<128x384xbf16>, vector<1x384xf32> -> vector<1x384xf32>
    %14 = vector.extract_strided_slice %10 {offsets = [0, 0], sizes = [1, 256], strides = [1, 1]} : vector<1x384xf32> to vector<1x256xf32>
    %15 = vector.extract_strided_slice %13 {offsets = [0, 0], sizes = [1, 256], strides = [1, 1]} : vector<1x384xf32> to vector<1x256xf32>
    %16 = arith.addf %14, %15 : vector<1x256xf32>
    %17 = arith.addf %16, %6 : vector<1x256xf32>
    %18 = arith.negf %17 : vector<1x256xf32>
    %19 = math.exp %18 : vector<1x256xf32>
    %cst_14 = arith.constant 1.000000e+00 : f32
    %20 = vector.broadcast %cst_14 : f32 to vector<1x256xf32>
    %21 = arith.addf %20, %19 : vector<1x256xf32>
    %22 = arith.divf %20, %21 : vector<1x256xf32>
    %23 = vector.extract_strided_slice %22 {offsets = [0, 0], sizes = [1, 128], strides = [1, 1]} : vector<1x256xf32> to vector<1x128xf32>
    %24 = vector.extract_strided_slice %22 {offsets = [0, 128], sizes = [1, 128], strides = [1, 1]} : vector<1x256xf32> to vector<1x128xf32>
    %25 = vector.extract_strided_slice %10 {offsets = [0, 256], sizes = [1, 128], strides = [1, 1]} : vector<1x384xf32> to vector<1x128xf32>
    %26 = arith.addf %25, %7 : vector<1x128xf32>
    %27 = vector.extract_strided_slice %13 {offsets = [0, 256], sizes = [1, 128], strides = [1, 1]} : vector<1x384xf32> to vector<1x128xf32>
    %28 = arith.addf %27, %8 : vector<1x128xf32>
    %29 = arith.mulf %23, %28 : vector<1x128xf32>
    %30 = arith.addf %26, %29 : vector<1x128xf32>
    %31 = math.tanh %30 : vector<1x128xf32>
    %cst_15 = arith.constant 1.000000e+00 : f32
    %32 = vector.broadcast %cst_15 : f32 to vector<1x128xf32>
    %33 = arith.subf %32, %24 : vector<1x128xf32>
    %34 = arith.mulf %33, %31 : vector<1x128xf32>
    %35 = arith.mulf %24, %4 : vector<1x128xf32>
    %36 = arith.addf %34, %35 : vector<1x128xf32>
    %37 = arith.truncf %36 : vector<1x128xf32> to vector<1x128xbf16>
    %cst_16 = arith.constant dense<0.000000e+00> : vector<1x768xf32>
    %38 = tpu.matmul %37, %5, %cst_16 {dimension_numbers = #tpu.dot_dimension_numbers<[1], [0], [0], [1], [0, 0, 1, 1], [], []>} : vector<1x128xbf16>, vector<128x768xbf16>, vector<1x768xf32> -> vector<1x768xf32>
    %39 = vector.extract_strided_slice %38 {offsets = [0, 0], sizes = [1, 384], strides = [1, 1]} : vector<1x768xf32> to vector<1x384xf32>
    %40 = vector.extract_strided_slice %38 {offsets = [0, 384], sizes = [1, 384], strides = [1, 1]} : vector<1x768xf32> to vector<1x384xf32>
    %41 = vector.extract_strided_slice %39 {offsets = [0, 0], sizes = [1, 256], strides = [1, 1]} : vector<1x384xf32> to vector<1x256xf32>
    %42 = vector.extract_strided_slice %40 {offsets = [0, 0], sizes = [1, 256], strides = [1, 1]} : vector<1x384xf32> to vector<1x256xf32>
    %43 = arith.addf %41, %42 : vector<1x256xf32>
    %44 = arith.addf %43, %6 : vector<1x256xf32>
    %45 = arith.negf %44 : vector<1x256xf32>
    %46 = math.exp %45 : vector<1x256xf32>
    %cst_17 = arith.constant 1.000000e+00 : f32
    %47 = vector.broadcast %cst_17 : f32 to vector<1x256xf32>
    %48 = arith.addf %47, %46 : vector<1x256xf32>
    %49 = arith.divf %47, %48 : vector<1x256xf32>
    %50 = vector.extract_strided_slice %49 {offsets = [0, 0], sizes = [1, 128], strides = [1, 1]} : vector<1x256xf32> to vector<1x128xf32>
    %51 = vector.extract_strided_slice %49 {offsets = [0, 128], sizes = [1, 128], strides = [1, 1]} : vector<1x256xf32> to vector<1x128xf32>
    %52 = vector.extract_strided_slice %39 {offsets = [0, 256], sizes = [1, 128], strides = [1, 1]} : vector<1x384xf32> to vector<1x128xf32>
    %53 = arith.addf %52, %7 : vector<1x128xf32>
    %54 = vector.extract_strided_slice %40 {offsets = [0, 256], sizes = [1, 128], strides = [1, 1]} : vector<1x384xf32> to vector<1x128xf32>
    %55 = arith.addf %54, %8 : vector<1x128xf32>
    %56 = arith.mulf %50, %55 : vector<1x128xf32>
    %57 = arith.addf %53, %56 : vector<1x128xf32>
    %58 = math.tanh %57 : vector<1x128xf32>
    %cst_18 = arith.constant 1.000000e+00 : f32
    %59 = vector.broadcast %cst_18 : f32 to vector<1x128xf32>
    %60 = arith.subf %59, %51 : vector<1x128xf32>
    %61 = arith.mulf %60, %58 : vector<1x128xf32>
    %62 = arith.mulf %51, %36 : vector<1x128xf32>
    %63 = arith.addf %61, %62 : vector<1x128xf32>
    %64 = arith.truncf %63 : vector<1x128xf32> to vector<1x128xbf16>
    %cst_19 = arith.constant dense<0.000000e+00> : vector<1x768xf32>
    %65 = tpu.matmul %64, %5, %cst_19 {dimension_numbers = #tpu.dot_dimension_numbers<[1], [0], [0], [1], [0, 0, 1, 1], [], []>} : vector<1x128xbf16>, vector<128x768xbf16>, vector<1x768xf32> -> vector<1x768xf32>
    %66 = vector.extract_strided_slice %65 {offsets = [0, 0], sizes = [1, 384], strides = [1, 1]} : vector<1x768xf32> to vector<1x384xf32>
    %67 = vector.extract_strided_slice %65 {offsets = [0, 384], sizes = [1, 384], strides = [1, 1]} : vector<1x768xf32> to vector<1x384xf32>
    %68 = vector.extract_strided_slice %66 {offsets = [0, 0], sizes = [1, 256], strides = [1, 1]} : vector<1x384xf32> to vector<1x256xf32>
    %69 = vector.extract_strided_slice %67 {offsets = [0, 0], sizes = [1, 256], strides = [1, 1]} : vector<1x384xf32> to vector<1x256xf32>
    %70 = arith.addf %68, %69 : vector<1x256xf32>
    %71 = arith.addf %70, %6 : vector<1x256xf32>
    %72 = arith.negf %71 : vector<1x256xf32>
    %73 = math.exp %72 : vector<1x256xf32>
    %cst_20 = arith.constant 1.000000e+00 : f32
    %74 = vector.broadcast %cst_20 : f32 to vector<1x256xf32>
    %75 = arith.addf %74, %73 : vector<1x256xf32>
    %76 = arith.divf %74, %75 : vector<1x256xf32>
    %77 = vector.extract_strided_slice %76 {offsets = [0, 0], sizes = [1, 128], strides = [1, 1]} : vector<1x256xf32> to vector<1x128xf32>
    %78 = vector.extract_strided_slice %76 {offsets = [0, 128], sizes = [1, 128], strides = [1, 1]} : vector<1x256xf32> to vector<1x128xf32>
    %79 = vector.extract_strided_slice %66 {offsets = [0, 256], sizes = [1, 128], strides = [1, 1]} : vector<1x384xf32> to vector<1x128xf32>
    %80 = arith.addf %79, %7 : vector<1x128xf32>
    %81 = vector.extract_strided_slice %67 {offsets = [0, 256], sizes = [1, 128], strides = [1, 1]} : vector<1x384xf32> to vector<1x128xf32>
    %82 = arith.addf %81, %8 : vector<1x128xf32>
    %83 = arith.mulf %77, %82 : vector<1x128xf32>
    %84 = arith.addf %80, %83 : vector<1x128xf32>
    %85 = math.tanh %84 : vector<1x128xf32>
    %cst_21 = arith.constant 1.000000e+00 : f32
    %86 = vector.broadcast %cst_21 : f32 to vector<1x128xf32>
    %87 = arith.subf %86, %78 : vector<1x128xf32>
    %88 = arith.mulf %87, %85 : vector<1x128xf32>
    %89 = arith.mulf %78, %63 : vector<1x128xf32>
    %90 = arith.addf %88, %89 : vector<1x128xf32>
    %91 = arith.truncf %90 : vector<1x128xf32> to vector<1x128xbf16>
    %cst_22 = arith.constant dense<0.000000e+00> : vector<1x768xf32>
    %92 = tpu.matmul %91, %5, %cst_22 {dimension_numbers = #tpu.dot_dimension_numbers<[1], [0], [0], [1], [0, 0, 1, 1], [], []>} : vector<1x128xbf16>, vector<128x768xbf16>, vector<1x768xf32> -> vector<1x768xf32>
    %93 = vector.extract_strided_slice %92 {offsets = [0, 0], sizes = [1, 384], strides = [1, 1]} : vector<1x768xf32> to vector<1x384xf32>
    %94 = vector.extract_strided_slice %92 {offsets = [0, 384], sizes = [1, 384], strides = [1, 1]} : vector<1x768xf32> to vector<1x384xf32>
    %95 = vector.extract_strided_slice %93 {offsets = [0, 0], sizes = [1, 256], strides = [1, 1]} : vector<1x384xf32> to vector<1x256xf32>
    %96 = vector.extract_strided_slice %94 {offsets = [0, 0], sizes = [1, 256], strides = [1, 1]} : vector<1x384xf32> to vector<1x256xf32>
    %97 = arith.addf %95, %96 : vector<1x256xf32>
    %98 = arith.addf %97, %6 : vector<1x256xf32>
    %99 = arith.negf %98 : vector<1x256xf32>
    %100 = math.exp %99 : vector<1x256xf32>
    %cst_23 = arith.constant 1.000000e+00 : f32
    %101 = vector.broadcast %cst_23 : f32 to vector<1x256xf32>
    %102 = arith.addf %101, %100 : vector<1x256xf32>
    %103 = arith.divf %101, %102 : vector<1x256xf32>
    %104 = vector.extract_strided_slice %103 {offsets = [0, 0], sizes = [1, 128], strides = [1, 1]} : vector<1x256xf32> to vector<1x128xf32>
    %105 = vector.extract_strided_slice %103 {offsets = [0, 128], sizes = [1, 128], strides = [1, 1]} : vector<1x256xf32> to vector<1x128xf32>
    %106 = vector.extract_strided_slice %93 {offsets = [0, 256], sizes = [1, 128], strides = [1, 1]} : vector<1x384xf32> to vector<1x128xf32>
    %107 = arith.addf %106, %7 : vector<1x128xf32>
    %108 = vector.extract_strided_slice %94 {offsets = [0, 256], sizes = [1, 128], strides = [1, 1]} : vector<1x384xf32> to vector<1x128xf32>
    %109 = arith.addf %108, %8 : vector<1x128xf32>
    %110 = arith.mulf %104, %109 : vector<1x128xf32>
    %111 = arith.addf %107, %110 : vector<1x128xf32>
    %112 = math.tanh %111 : vector<1x128xf32>
    %cst_24 = arith.constant 1.000000e+00 : f32
    %113 = vector.broadcast %cst_24 : f32 to vector<1x128xf32>
    %114 = arith.subf %113, %105 : vector<1x128xf32>
    %115 = arith.mulf %114, %112 : vector<1x128xf32>
    %116 = arith.mulf %105, %90 : vector<1x128xf32>
    %117 = arith.addf %115, %116 : vector<1x128xf32>
    %118 = arith.truncf %117 : vector<1x128xf32> to vector<1x128xbf16>
    %cst_25 = arith.constant dense<0.000000e+00> : vector<1x768xf32>
    %119 = tpu.matmul %118, %5, %cst_25 {dimension_numbers = #tpu.dot_dimension_numbers<[1], [0], [0], [1], [0, 0, 1, 1], [], []>} : vector<1x128xbf16>, vector<128x768xbf16>, vector<1x768xf32> -> vector<1x768xf32>
    %120 = vector.extract_strided_slice %119 {offsets = [0, 0], sizes = [1, 384], strides = [1, 1]} : vector<1x768xf32> to vector<1x384xf32>
    %121 = vector.extract_strided_slice %119 {offsets = [0, 384], sizes = [1, 384], strides = [1, 1]} : vector<1x768xf32> to vector<1x384xf32>
    %122 = vector.extract_strided_slice %120 {offsets = [0, 0], sizes = [1, 256], strides = [1, 1]} : vector<1x384xf32> to vector<1x256xf32>
    %123 = vector.extract_strided_slice %121 {offsets = [0, 0], sizes = [1, 256], strides = [1, 1]} : vector<1x384xf32> to vector<1x256xf32>
    %124 = arith.addf %122, %123 : vector<1x256xf32>
    %125 = arith.addf %124, %6 : vector<1x256xf32>
    %126 = arith.negf %125 : vector<1x256xf32>
    %127 = math.exp %126 : vector<1x256xf32>
    %cst_26 = arith.constant 1.000000e+00 : f32
    %128 = vector.broadcast %cst_26 : f32 to vector<1x256xf32>
    %129 = arith.addf %128, %127 : vector<1x256xf32>
    %130 = arith.divf %128, %129 : vector<1x256xf32>
    %131 = vector.extract_strided_slice %130 {offsets = [0, 0], sizes = [1, 128], strides = [1, 1]} : vector<1x256xf32> to vector<1x128xf32>
    %132 = vector.extract_strided_slice %130 {offsets = [0, 128], sizes = [1, 128], strides = [1, 1]} : vector<1x256xf32> to vector<1x128xf32>
    %133 = vector.extract_strided_slice %120 {offsets = [0, 256], sizes = [1, 128], strides = [1, 1]} : vector<1x384xf32> to vector<1x128xf32>
    %134 = arith.addf %133, %7 : vector<1x128xf32>
    %135 = vector.extract_strided_slice %121 {offsets = [0, 256], sizes = [1, 128], strides = [1, 1]} : vector<1x384xf32> to vector<1x128xf32>
    %136 = arith.addf %135, %8 : vector<1x128xf32>
    %137 = arith.mulf %131, %136 : vector<1x128xf32>
    %138 = arith.addf %134, %137 : vector<1x128xf32>
    %139 = math.tanh %138 : vector<1x128xf32>
    %cst_27 = arith.constant 1.000000e+00 : f32
    %140 = vector.broadcast %cst_27 : f32 to vector<1x128xf32>
    %141 = arith.subf %140, %132 : vector<1x128xf32>
    %142 = arith.mulf %141, %139 : vector<1x128xf32>
    %143 = arith.mulf %132, %117 : vector<1x128xf32>
    %144 = arith.addf %142, %143 : vector<1x128xf32>
    %145 = arith.truncf %144 : vector<1x128xf32> to vector<1x128xbf16>
    %c0_28 = arith.constant 0 : index
    %c0_29 = arith.constant 0 : index
    %146 = vector.load %arg8[%c0_28, %c0_29] : memref<128x128xbf16, #tpu.memory_space<vmem>>, vector<128x128xbf16>
    %cst_30 = arith.constant dense<0.000000e+00> : vector<1x128xf32>
    %147 = tpu.matmul %145, %146, %cst_30 {dimension_numbers = #tpu.dot_dimension_numbers<[1], [0], [0], [1], [0, 0, 1, 1], [], []>} : vector<1x128xbf16>, vector<128x128xbf16>, vector<1x128xf32> -> vector<1x128xf32>
    %c0_31 = arith.constant 0 : index
    %c0_32 = arith.constant 0 : index
    %148 = vector.load %arg9[%c0_31, %c0_32] : memref<1x128xf32, #tpu.memory_space<vmem>>, vector<1x128xf32>
    %149 = arith.addf %147, %148 : vector<1x128xf32>
    %cst_33 = arith.constant dense<0xFF800000> : vector<1xf32>
    %150 = vector.multi_reduction <maximumf>, %149, %cst_33 [1] : vector<1x128xf32> to vector<1xf32>
    %151 = vector.shape_cast %150 : vector<1xf32> to vector<1x1xf32>
    %152 = vector.broadcast %151 : vector<1x1xf32> to vector<1x128xf32>
    %153 = arith.subf %149, %152 : vector<1x128xf32>
    %154 = math.exp %153 : vector<1x128xf32>
    %cst_34 = arith.constant dense<0.000000e+00> : vector<1xf32>
    %155 = vector.multi_reduction <add>, %154, %cst_34 [1] : vector<1x128xf32> to vector<1xf32>
    %156 = vector.shape_cast %155 : vector<1xf32> to vector<1x1xf32>
    %157 = math.log %156 : vector<1x1xf32>
    %158 = arith.addf %151, %157 : vector<1x1xf32>
    %159 = vector.broadcast %158 : vector<1x1xf32> to vector<1x128xf32>
    %160 = arith.subf %149, %159 : vector<1x128xf32>
    %c0_35 = arith.constant 0 : index
    %c0_36 = arith.constant 0 : index
    %161 = vector.load %arg10[%c0_35, %c0_36] : memref<1x128xf32, #tpu.memory_space<vmem>>, vector<1x128xf32>
    tpu.vector_store %arg10[%c0_35, %c0_36], %160 {strides = array<i32>} : memref<1x128xf32, #tpu.memory_space<vmem>>, vector<1x128xf32>,
    %c0_37 = arith.constant 0 : index
    %c0_38 = arith.constant 0 : index
    %162 = vector.load %arg11[%c0_37, %c0_38] : memref<1x128xf32, #tpu.memory_space<vmem>>, vector<1x128xf32>
    tpu.vector_store %arg11[%c0_37, %c0_38], %144 {strides = array<i32>} : memref<1x128xf32, #tpu.memory_space<vmem>>, vector<1x128xf32>,
    return
  }
  func.func @transform_0(%arg0: i32, %arg1: memref<1xi32, #tpu.memory_space<smem>>) -> (i32, i32) {
    %c0_i32 = arith.constant 0 : i32
    %c0_i32_0 = arith.constant 0 : i32
    %c0_i32_1 = arith.constant 0 : i32
    return %c0_i32, %c0_i32_0 : i32, i32
  }
  func.func @transform_1(%arg0: i32, %arg1: memref<1xi32, #tpu.memory_space<smem>>) -> (i32, i32, i32) {
    %c0 = arith.constant 0 : index
    %0 = memref.load %arg1[%c0] : memref<1xi32, #tpu.memory_space<smem>>
    %c0_i32 = arith.constant 0 : i32
    %c0_i32_0 = arith.constant 0 : i32
    %c0_i32_1 = arith.constant 0 : i32
    return %0, %c0_i32, %c0_i32_0 : i32, i32, i32
  }
  func.func @transform_2(%arg0: i32, %arg1: memref<1xi32, #tpu.memory_space<smem>>) -> (i32, i32) {
    %c0_i32 = arith.constant 0 : i32
    %c0_i32_0 = arith.constant 0 : i32
    %c0_i32_1 = arith.constant 0 : i32
    return %c0_i32, %c0_i32_0 : i32, i32
  }
  func.func @transform_3(%arg0: i32, %arg1: memref<1xi32, #tpu.memory_space<smem>>) -> (i32, i32) {
    %c0_i32 = arith.constant 0 : i32
    %c0_i32_0 = arith.constant 0 : i32
    %c0_i32_1 = arith.constant 0 : i32
    return %c0_i32, %c0_i32_0 : i32, i32
  }
  func.func @transform_4(%arg0: i32, %arg1: memref<1xi32, #tpu.memory_space<smem>>) -> (i32, i32) {
    %c0_i32 = arith.constant 0 : i32
    %c0_i32_0 = arith.constant 0 : i32
    %c0_i32_1 = arith.constant 0 : i32
    return %c0_i32, %c0_i32_0 : i32, i32
  }
  func.func @transform_5(%arg0: i32, %arg1: memref<1xi32, #tpu.memory_space<smem>>) -> (i32, i32) {
    %c0_i32 = arith.constant 0 : i32
    %c0_i32_0 = arith.constant 0 : i32
    %c0_i32_1 = arith.constant 0 : i32
    return %c0_i32, %c0_i32_0 : i32, i32
  }
  func.func @transform_6(%arg0: i32, %arg1: memref<1xi32, #tpu.memory_space<smem>>) -> (i32, i32) {
    %c0_i32 = arith.constant 0 : i32
    %c0_i32_0 = arith.constant 0 : i32
    %c0_i32_1 = arith.constant 0 : i32
    return %c0_i32, %c0_i32_0 : i32, i32
  }
  func.func @transform_7(%arg0: i32, %arg1: memref<1xi32, #tpu.memory_space<smem>>) -> (i32, i32) {
    %c0_i32 = arith.constant 0 : i32
    %c0_i32_0 = arith.constant 0 : i32
    %c0_i32_1 = arith.constant 0 : i32
    return %c0_i32, %c0_i32_0 : i32, i32
  }
  func.func @transform_8(%arg0: i32, %arg1: memref<1xi32, #tpu.memory_space<smem>>) -> (i32, i32) {
    %c0_i32 = arith.constant 0 : i32
    %c0_i32_0 = arith.constant 0 : i32
    %c0_i32_1 = arith.constant 0 : i32
    return %c0_i32, %c0_i32_0 : i32, i32
  }
  func.func @transform_9(%arg0: i32, %arg1: memref<1xi32, #tpu.memory_space<smem>>) -> (i32, i32) {
    %c0_i32 = arith.constant 0 : i32
    %c0_i32_0 = arith.constant 0 : i32
    %c0_i32_1 = arith.constant 0 : i32
    return %c0_i32, %c0_i32_0 : i32, i32
  }
}

</mosaic_0001>

<llo_original>
// kernel: decoder_rnn_forward.1
$region0: #{decoder_rnn_forward.1}
  #allocation0 [shape = 'u32[]', space=smem, size = 0x4, offset = 0x4, fixed_abs, tag = 'smem constant byte address 0x4 - core index']
  #allocation1 [shape = 'u32[144,128]{1,0:T(1,128)}', space=vmem, size = 0x12000, scoped, tag = 'internal scratch']
  #allocation2 [shape = 's32[1]{0}', space=sflag, size = 0x4, scoped, tag = 'scoped memory for decoder_rnn_forward.1']
  #allocation3 [shape = 's32[1]{0:T(128)S(6)}', space=smem, size = 0x200, scoped, tag = 'prefetched SMEM operand 0']
  %s0 = inlined_call_operand.<no memory space> [shape: s32[1], index: 0, kind: input, shape index: {}]
  %s1 = inlined_call_operand.vmem [shape: f32[1,128], index: 1, kind: input, shape index: {}]
  %s2 = inlined_call_operand.vmem [shape: bf16[16,1,128], index: 2, kind: input, shape index: {}]
  %s3 = inlined_call_operand.vmem [shape: bf16[128,768], index: 3, kind: input, shape index: {}]
  %s4 = inlined_call_operand.vmem [shape: f32[1,256], index: 4, kind: input, shape index: {}]
  %s5 = inlined_call_operand.vmem [shape: f32[1,128], index: 5, kind: input, shape index: {}]
  %s6 = inlined_call_operand.vmem [shape: f32[1,128], index: 6, kind: input, shape index: {}]
  %s7 = inlined_call_operand.vmem [shape: bf16[128,128], index: 7, kind: input, shape index: {}]
  %s8 = inlined_call_operand.vmem [shape: f32[1,128], index: 8, kind: input, shape index: {}]
  %s9 = inlined_call_operand.hbm [shape: f32[1,128], index: 9, kind: output, shape index: {0}]
  %s10 = inlined_call_operand.vmem [shape: f32[1,128], index: 10, kind: output, shape index: {1}]
  %11 = xla_tuple %s9, %s10
  %s12 = sld [smem:[#allocation0]]
  $region50: #{decoder_rnn_forward.1} parent=0
    _
  %s14 = ssub.s32 1, %s12
  %s15 = scalar_select 0, %s14, %s12
  %16 = sst [smem:[#allocation3]] %s0
  $region1: #{decoder_rnn_forward.1} parent=0
    #allocation4 [shape = 'u8[512]{0}', space=vmem, size = 0x400, scoped, tag = 'output window, operand 0, single buffered']
    #allocation5 [shape = 's32[1]{0}', space=sflag, size = 0x4, scoped, tag = 'scoped memory for decoder_rnn_forward.1']
    %17 = vsyncpa [#allocation5], 0
    // Predicated region
    $region2: #{decoder_rnn_forward.1} parent=1 // pred_check
      _
    $region3: #{decoder_rnn_forward.1} parent=1 // pred_check_branch
      %19 = sbr.rel (0) target = $region5
    $region4: #{decoder_rnn_forward.1} parent=1 // pred_region
      _
    $region5: #{decoder_rnn_forward.1} parent=1 // pred_fallthru
      _
    // Predicated region
    $region6: #{decoder_rnn_forward.1} parent=1 // pred_check
      _
    $region7: #{decoder_rnn_forward.1} parent=1 // pred_check_branch
      %21 = sbr.rel (0) target = $region9
    $region8: #{decoder_rnn_forward.1} parent=1 // pred_region
      %s22 = sld [smem:[#allocation3]]
      %p23 = scmp.lt.s32.totalorder %s22, 15
      %s24 = scalar_select %p23, %s22, 15
      %s25 = scalar_lea.vmem %s2, %s24
      %s26 = sld [smem:[#allocation3]]
    $region9: #{decoder_rnn_forward.1} parent=1 // pred_fallthru
      _
    // Predicated region
    $region10: #{decoder_rnn_forward.1} parent=1 // pred_check
      _
    $region11: #{decoder_rnn_forward.1} parent=1 // pred_check_branch
      %28 = sbr.rel (0) target = $region13
    $region12: #{decoder_rnn_forward.1} parent=1 // pred_region
      _
    $region13: #{decoder_rnn_forward.1} parent=1 // pred_fallthru
      _
    // Predicated region
    $region14: #{decoder_rnn_forward.1} parent=1 // pred_check
      _
    $region15: #{decoder_rnn_forward.1} parent=1 // pred_check_branch
      %30 = sbr.rel (0) target = $region17
    $region16: #{decoder_rnn_forward.1} parent=1 // pred_region
      _
    $region17: #{decoder_rnn_forward.1} parent=1 // pred_fallthru
      _
    // Predicated region
    $region18: #{decoder_rnn_forward.1} parent=1 // pred_check
      _
    $region19: #{decoder_rnn_forward.1} parent=1 // pred_check_branch
      %32 = sbr.rel (0) target = $region21
    $region20: #{decoder_rnn_forward.1} parent=1 // pred_region
      _
    $region21: #{decoder_rnn_forward.1} parent=1 // pred_fallthru
      _
    // Predicated region
    $region22: #{decoder_rnn_forward.1} parent=1 // pred_check
      _
    $region23: #{decoder_rnn_forward.1} parent=1 // pred_check_branch
      %34 = sbr.rel (0) target = $region25
    $region24: #{decoder_rnn_forward.1} parent=1 // pred_region
      _
    $region25: #{decoder_rnn_forward.1} parent=1 // pred_fallthru
      _
    // Predicated region
    $region26: #{decoder_rnn_forward.1} parent=1 // pred_check
      _
    $region27: #{decoder_rnn_forward.1} parent=1 // pred_check_branch
      %36 = sbr.rel (0) target = $region29
    $region28: #{decoder_rnn_forward.1} parent=1 // pred_region
      _
    $region29: #{decoder_rnn_forward.1} parent=1 // pred_fallthru
      _
    // Predicated region
    $region30: #{decoder_rnn_forward.1} parent=1 // pred_check
      _
    $region31: #{decoder_rnn_forward.1} parent=1 // pred_check_branch
      %38 = sbr.rel (0) target = $region33
    $region32: #{decoder_rnn_forward.1} parent=1 // pred_region
      _
    $region33: #{decoder_rnn_forward.1} parent=1 // pred_fallthru
      _
    %s39 = sld [smem:[#allocation3]]
    %p40 = scmp.lt.s32.totalorder %s39, 15
    %s41 = scalar_select %p40, %s39, 15
    %s42 = scalar_lea.vmem %s2, %s41
    %s43 = sld [smem:[#allocation3]]
    %p44 = scmp.lt.s32.totalorder %s43, 15
    %s45 = scalar_select %p44, %s43, 15
    %s46 = scalar_lea.vmem %s2, %s45
    %s47 = sld [smem:[#allocation3]]
    %v49 = vld [vmem:[%s46] sm:$0x1]
    %v50 = vmax.bf16 %v49, 0
    %v51 = vld [vmem:[%s1] sm:$0x1]
    %v52 = vld [vmem:[%s3] sm:$0xff]
    %v53 = vld [vmem:[%s3 + $0x8] sm:$0xff]
    %v54 = vld [vmem:[%s3 + $0x10] sm:$0xff]
    %v55 = vld [vmem:[%s3 + $0x18] sm:$0xff]
    %v56 = vld [vmem:[%s3 + $0x20] sm:$0xff]
    %v57 = vld [vmem:[%s3 + $0x28] sm:$0xff]
    %v58 = vld [vmem:[%s3 + $0x30] sm:$0xff]
    %v59 = vld [vmem:[%s3 + $0x38] sm:$0xff]
    %v60 = vld [vmem:[%s3 + $0x40] sm:$0xff]
    %v61 = vld [vmem:[%s3 + $0x48] sm:$0xff]
    %v62 = vld [vmem:[%s3 + $0x50] sm:$0xff]
    %v63 = vld [vmem:[%s3 + $0x58] sm:$0xff]
    %v64 = vld [vmem:[%s3 + $0x60] sm:$0xff]
    %v65 = vld [vmem:[%s3 + $0x68] sm:$0xff]
    %v66 = vld [vmem:[%s3 + $0x70] sm:$0xff]
    %v67 = vld [vmem:[%s3 + $0x78] sm:$0xff]
    %v68 = vld [vmem:[%s3 + $0x80] sm:$0xff]
    %v69 = vld [vmem:[%s3 + $0x88] sm:$0xff]
    %v70 = vld [vmem:[%s3 + $0x90] sm:$0xff]
    %v71 = vld [vmem:[%s3 + $0x98] sm:$0xff]
    %v72 = vld [vmem:[%s3 + $0xa0] sm:$0xff]
    %v73 = vld [vmem:[%s3 + $0xa8] sm:$0xff]
    %v74 = vld [vmem:[%s3 + $0xb0] sm:$0xff]
    %v75 = vld [vmem:[%s3 + $0xb8] sm:$0xff]
    %v76 = vld [vmem:[%s3 + $0xc0] sm:$0xff]
    %v77 = vld [vmem:[%s3 + $0xc8] sm:$0xff]
    %v78 = vld [vmem:[%s3 + $0xd0] sm:$0xff]
    %v79 = vld [vmem:[%s3 + $0xd8] sm:$0xff]
    %v80 = vld [vmem:[%s3 + $0xe0] sm:$0xff]
    %v81 = vld [vmem:[%s3 + $0xe8] sm:$0xff]
    %v82 = vld [vmem:[%s3 + $0xf0] sm:$0xff]
    %v83 = vld [vmem:[%s3 + $0xf8] sm:$0xff]
    %v84 = vld [vmem:[%s3 + $0x100] sm:$0xff]
    %v85 = vld [vmem:[%s3 + $0x108] sm:$0xff]
    %v86 = vld [vmem:[%s3 + $0x110] sm:$0xff]
    %v87 = vld [vmem:[%s3 + $0x118] sm:$0xff]
    %v88 = vld [vmem:[%s3 + $0x120] sm:$0xff]
    %v89 = vld [vmem:[%s3 + $0x128] sm:$0xff]
    %v90 = vld [vmem:[%s3 + $0x130] sm:$0xff]
    %v91 = vld [vmem:[%s3 + $0x138] sm:$0xff]
    %v92 = vld [vmem:[%s3 + $0x140] sm:$0xff]
    %v93 = vld [vmem:[%s3 + $0x148] sm:$0xff]
    %v94 = vld [vmem:[%s3 + $0x150] sm:$0xff]
    %v95 = vld [vmem:[%s3 + $0x158] sm:$0xff]
    %v96 = vld [vmem:[%s3 + $0x160] sm:$0xff]
    %v97 = vld [vmem:[%s3 + $0x168] sm:$0xff]
    %v98 = vld [vmem:[%s3 + $0x170] sm:$0xff]
    %v99 = vld [vmem:[%s3 + $0x178] sm:$0xff]
    %v100 = vld [vmem:[%s4] sm:$0x3]
    %v101 = vld [vmem:[%s5] sm:$0x1]
    %v102 = vld [vmem:[%s6] sm:$0x1]
    %v135 = vunpack.c.l.b16 %v52
    %v136 = vunpack.c.h.b16 %v52
    %v137 = vunpack.c.l.b16 %v53
    %v138 = vunpack.c.l.b16 %v55
    %v139 = vunpack.c.h.b16 %v55
    %v140 = vunpack.c.l.b16 %v56
    %v141 = vunpack.c.l.b16 %v58
    %v142 = vunpack.c.h.b16 %v58
    %v143 = vunpack.c.l.b16 %v59
    %v144 = vunpack.c.l.b16 %v61
    %v145 = vunpack.c.h.b16 %v61
    %v146 = vunpack.c.l.b16 %v62
    %v147 = vunpack.c.l.b16 %v64
    %v148 = vunpack.c.h.b16 %v64
    %v149 = vunpack.c.l.b16 %v65
    %v150 = vunpack.c.l.b16 %v67
    %v151 = vunpack.c.h.b16 %v67
    %v152 = vunpack.c.l.b16 %v68
    %v153 = vunpack.c.l.b16 %v70
    %v154 = vunpack.c.h.b16 %v70
    %v155 = vunpack.c.l.b16 %v71
    %v156 = vunpack.c.l.b16 %v73
    %v157 = vunpack.c.h.b16 %v73
    %v158 = vunpack.c.l.b16 %v74
    %v159 = vunpack.c.l.b16 %v76
    %v160 = vunpack.c.h.b16 %v76
    %v161 = vunpack.c.l.b16 %v77
    %v162 = vunpack.c.l.b16 %v79
    %v163 = vunpack.c.h.b16 %v79
    %v164 = vunpack.c.l.b16 %v80
    %v165 = vunpack.c.l.b16 %v82
    %v166 = vunpack.c.h.b16 %v82
    %v167 = vunpack.c.l.b16 %v83
    %v168 = vunpack.c.l.b16 %v85
    %v169 = vunpack.c.h.b16 %v85
    %v170 = vunpack.c.l.b16 %v86
    %v171 = vunpack.c.l.b16 %v88
    %v172 = vunpack.c.h.b16 %v88
    %v173 = vunpack.c.l.b16 %v89
    %v174 = vunpack.c.l.b16 %v91
    %v175 = vunpack.c.h.b16 %v91
    %v176 = vunpack.c.l.b16 %v92
    %v177 = vunpack.c.l.b16 %v94
    %v178 = vunpack.c.h.b16 %v94
    %v179 = vunpack.c.l.b16 %v95
    %v180 = vunpack.c.l.b16 %v97
    %v181 = vunpack.c.h.b16 %v97
    %v182 = vunpack.c.l.b16 %v98
    %v183 = vpack.c.b16 %v138, %v135
    %v184 = vpack.c.b16 %v139, %v136
    %v185 = vpack.c.b16 %v140, %v137
    %v186 = vpack.c.b16 %v144, %v141
    %v187 = vpack.c.b16 %v145, %v142
    %v188 = vpack.c.b16 %v146, %v143
    %v189 = vpack.c.b16 %v150, %v147
    %v190 = vpack.c.b16 %v151, %v148
    %v191 = vpack.c.b16 %v152, %v149
    %v192 = vpack.c.b16 %v156, %v153
    %v193 = vpack.c.b16 %v157, %v154
    %v194 = vpack.c.b16 %v158, %v155
    %v195 = vpack.c.b16 %v162, %v159
    %v196 = vpack.c.b16 %v163, %v160
    %v197 = vpack.c.b16 %v164, %v161
    %v198 = vpack.c.b16 %v168, %v165
    %v199 = vpack.c.b16 %v169, %v166
    %v200 = vpack.c.b16 %v170, %v167
    %v201 = vpack.c.b16 %v174, %v171
    %v202 = vpack.c.b16 %v175, %v172
    %v203 = vpack.c.b16 %v176, %v173
    %v204 = vpack.c.b16 %v180, %v177
    %v205 = vpack.c.b16 %v181, %v178
    %v206 = vpack.c.b16 %v182, %v179
    %231 = vmatprep.subr.bf16.mxu0 %v184
    %232 = vmatpush1.bf16.msra.mxu0 %v183
    %233 = vmatprep.subr.bf16.mxu0 %v187
    %234 = vmatpush1.bf16.msra.mxu0 %v186
    %235 = vmatprep.subr.bf16.mxu0 %v190
    %236 = vmatpush1.bf16.msra.mxu0 %v189
    %237 = vmatprep.subr.bf16.mxu0 %v193
    %238 = vmatpush1.bf16.msra.mxu0 %v192
    %239 = vmatprep.subr.bf16.mxu0 %v196
    %240 = vmatpush1.bf16.msra.mxu0 %v195
    %241 = vmatprep.subr.bf16.mxu0 %v199
    %242 = vmatpush1.bf16.msra.mxu0 %v198
    %243 = vmatprep.subr.bf16.mxu0 %v202
    %244 = vmatpush1.bf16.msra.mxu0 %v201
    %245 = vmatprep.subr.bf16.mxu0 %v205
    %246 = vmatpush1.bf16.msra.mxu0 %v204
    %247 = vmatprep.subr.bf16.mxu0 0
    %248 = vmatpush1.bf16.msra.mxu0 0
    %249 = vmatprep.subr.bf16.mxu0 0
    %250 = vmatpush1.bf16.msra.mxu0 0
    %251 = vmatprep.subr.bf16.mxu0 0
    %252 = vmatpush1.bf16.msra.mxu0 0
    %253 = vmatprep.subr.bf16.mxu0 0
    %254 = vmatpush1.bf16.msra.mxu0 0
    %255 = vmatprep.subr.bf16.mxu0 0
    %256 = vmatpush1.bf16.msra.mxu0 0
    %257 = vmatprep.subr.bf16.mxu0 0
    %258 = vmatpush1.bf16.msra.mxu0 0
    %259 = vmatprep.subr.bf16.mxu0 0
    %260 = vmatpush1.bf16.msra.mxu0 0
    %261 = vmatprep.subr.bf16.mxu0 0
    %262 = vmatpush1.bf16.msra.mxu0 0
    %263 = vmatprep.mubr.bf16.mxu0 0
    %264 = vmatmul.mubr.bf16.gmra.mrb[0].mxu0 %v50
    %v265 = vpop.f32.mrb[0].mxu0
    %v266 = vadd.f32 0.0, %v265
    %v267 = vpop.f32.mrb[0].mxu0
    %v268 = vadd.f32 0.0, %v267
    %v269 = vpop.f32.mrb[0].mxu0
    %v270 = vpop.f32.mrb[0].mxu0
    %271 = vdwg.mxu0
    %272 = vmatprep.subr.bf16.mxu0 0
    %273 = vmatpush1.bf16.msra.mxu0 %v185
    %274 = vmatprep.subr.bf16.mxu0 0
    %275 = vmatpush1.bf16.msra.mxu0 %v188
    %276 = vmatprep.subr.bf16.mxu0 0
    %277 = vmatpush1.bf16.msra.mxu0 %v191
    %278 = vmatprep.subr.bf16.mxu0 0
    %279 = vmatpush1.bf16.msra.mxu0 %v194
    %280 = vmatprep.subr.bf16.mxu0 0
    %281 = vmatpush1.bf16.msra.mxu0 %v197
    %282 = vmatprep.subr.bf16.mxu0 0
    %283 = vmatpush1.bf16.msra.mxu0 %v200
    %284 = vmatprep.subr.bf16.mxu0 0
    %285 = vmatpush1.bf16.msra.mxu0 %v203
    %286 = vmatprep.subr.bf16.mxu0 0
    %287 = vmatpush1.bf16.msra.mxu0 %v206
    %288 = vmatprep.subr.bf16.mxu0 0
    %289 = vmatpush1.bf16.msra.mxu0 0
    %290 = vmatprep.subr.bf16.mxu0 0
    %291 = vmatpush1.bf16.msra.mxu0 0
    %292 = vmatprep.subr.bf16.mxu0 0
    %293 = vmatpush1.bf16.msra.mxu0 0
    %294 = vmatprep.subr.bf16.mxu0 0
    %295 = vmatpush1.bf16.msra.mxu0 0
    %296 = vmatprep.subr.bf16.mxu0 0
    %297 = vmatpush1.bf16.msra.mxu0 0
    %298 = vmatprep.subr.bf16.mxu0 0
    %299 = vmatpush1.bf16.msra.mxu0 0
    %300 = vmatprep.subr.bf16.mxu0 0
    %301 = vmatpush1.bf16.msra.mxu0 0
    %302 = vmatprep.subr.bf16.mxu0 0
    %303 = vmatpush1.bf16.msra.mxu0 0
    %304 = vmatprep.mubr.bf16.mxu0 0
    %305 = vmatmul.mubr.bf16.gmra.mrb[0].mxu0 %v50
    %v306 = vpop.f32.mrb[0].mxu0
    %v307 = vadd.f32 0.0, %v306
    %v308 = vpop.f32.mrb[0].mxu0
    %v309 = vpop.f32.mrb[0].mxu0
    %v310 = vpop.f32.mrb[0].mxu0
    %311 = vdwg.mxu0
    %v312 = vpack.c.bf16 %v51, %v51
    %v329 = vunpack.c.h.b16 %v53
    %v330 = vunpack.c.l.b16 %v54
    %v331 = vunpack.c.h.b16 %v54
    %v332 = vunpack.c.h.b16 %v56
    %v333 = vunpack.c.l.b16 %v57
    %v334 = vunpack.c.h.b16 %v57
    %v335 = vunpack.c.h.b16 %v59
    %v336 = vunpack.c.l.b16 %v60
    %v337 = vunpack.c.h.b16 %v60
    %v338 = vunpack.c.h.b16 %v62
    %v339 = vunpack.c.l.b16 %v63
    %v340 = vunpack.c.h.b16 %v63
    %v341 = vunpack.c.h.b16 %v65
    %v342 = vunpack.c.l.b16 %v66
    %v343 = vunpack.c.h.b16 %v66
    %v344 = vunpack.c.h.b16 %v68
    %v345 = vunpack.c.l.b16 %v69
    %v346 = vunpack.c.h.b16 %v69
    %v347 = vunpack.c.h.b16 %v71
    %v348 = vunpack.c.l.b16 %v72
    %v349 = vunpack.c.h.b16 %v72
    %v350 = vunpack.c.h.b16 %v74
    %v351 = vunpack.c.l.b16 %v75
    %v352 = vunpack.c.h.b16 %v75
    %v353 = vunpack.c.h.b16 %v77
    %v354 = vunpack.c.l.b16 %v78
    %v355 = vunpack.c.h.b16 %v78
    %v356 = vunpack.c.h.b16 %v80
    %v357 = vunpack.c.l.b16 %v81
    %v358 = vunpack.c.h.b16 %v81
    %v359 = vunpack.c.h.b16 %v83
    %v360 = vunpack.c.l.b16 %v84
    %v361 = vunpack.c.h.b16 %v84
    %v362 = vunpack.c.h.b16 %v86
    %v363 = vunpack.c.l.b16 %v87
    %v364 = vunpack.c.h.b16 %v87
    %v365 = vunpack.c.h.b16 %v89
    %v366 = vunpack.c.l.b16 %v90
    %v367 = vunpack.c.h.b16 %v90
    %v368 = vunpack.c.h.b16 %v92
    %v369 = vunpack.c.l.b16 %v93
    %v370 = vunpack.c.h.b16 %v93
    %v371 = vunpack.c.h.b16 %v95
    %v372 = vunpack.c.l.b16 %v96
    %v373 = vunpack.c.h.b16 %v96
    %v374 = vunpack.c.h.b16 %v98
    %v375 = vunpack.c.l.b16 %v99
    %v376 = vunpack.c.h.b16 %v99
    %v377 = vpack.c.b16 %v332, %v329
    %v378 = vpack.c.b16 %v333, %v330
    %v379 = vpack.c.b16 %v334, %v331
    %v380 = vpack.c.b16 %v338, %v335
    %v381 = vpack.c.b16 %v339, %v336
    %v382 = vpack.c.b16 %v340, %v337
    %v383 = vpack.c.b16 %v344, %v341
    %v384 = vpack.c.b16 %v345, %v342
    %v385 = vpack.c.b16 %v346, %v343
    %v386 = vpack.c.b16 %v350, %v347
    %v387 = vpack.c.b16 %v351, %v348
    %v388 = vpack.c.b16 %v352, %v349
    %v389 = vpack.c.b16 %v356, %v353
    %v390 = vpack.c.b16 %v357, %v354
    %v391 = vpack.c.b16 %v358, %v355
    %v392 = vpack.c.b16 %v362, %v359
    %v393 = vpack.c.b16 %v363, %v360
    %v394 = vpack.c.b16 %v364, %v361
    %v395 = vpack.c.b16 %v368, %v365
    %v396 = vpack.c.b16 %v369, %v366
    %v397 = vpack.c.b16 %v370, %v367
    %v398 = vpack.c.b16 %v374, %v371
    %v399 = vpack.c.b16 %v375, %v372
    %v400 = vpack.c.b16 %v376, %v373
    %425 = vmatprep.subr.bf16.mxu0 %v378
    %426 = vmatpush1.bf16.msra.mxu0 %v377
    %427 = vmatprep.subr.bf16.mxu0 %v381
    %428 = vmatpush1.bf16.msra.mxu0 %v380
    %429 = vmatprep.subr.bf16.mxu0 %v384
    %430 = vmatpush1.bf16.msra.mxu0 %v383
    %431 = vmatprep.subr.bf16.mxu0 %v387
    %432 = vmatpush1.bf16.msra.mxu0 %v386
    %433 = vmatprep.subr.bf16.mxu0 %v390
    %434 = vmatpush1.bf16.msra.mxu0 %v389
    %435 = vmatprep.subr.bf16.mxu0 %v393
    %436 = vmatpush1.bf16.msra.mxu0 %v392
    %437 = vmatprep.subr.bf16.mxu0 %v396
    %438 = vmatpush1.bf16.msra.mxu0 %v395
    %439 = vmatprep.subr.bf16.mxu0 %v399
    %440 = vmatpush1.bf16.msra.mxu0 %v398
    %441 = vmatprep.subr.bf16.mxu0 0
    %442 = vmatpush1.bf16.msra.mxu0 0
    %443 = vmatprep.subr.bf16.mxu0 0
    %444 = vmatpush1.bf16.msra.mxu0 0
    %445 = vmatprep.subr.bf16.mxu0 0
    %446 = vmatpush1.bf16.msra.mxu0 0
    %447 = vmatprep.subr.bf16.mxu0 0
    %448 = vmatpush1.bf16.msra.mxu0 0
    %449 = vmatprep.subr.bf16.mxu0 0
    %450 = vmatpush1.bf16.msra.mxu0 0
    %451 = vmatprep.subr.bf16.mxu0 0
    %452 = vmatpush1.bf16.msra.mxu0 0
    %453 = vmatprep.subr.bf16.mxu0 0
    %454 = vmatpush1.bf16.msra.mxu0 0
    %455 = vmatprep.subr.bf16.mxu0 0
    %456 = vmatpush1.bf16.msra.mxu0 0
    %457 = vmatprep.mubr.bf16.mxu0 0
    %458 = vmatmul.mubr.bf16.gmra.mrb[0].mxu0 %v312
    %v459 = vpop.f32.mrb[0].mxu0
    %v460 = vadd.f32 0.0, %v459
    %v461 = vpop.f32.mrb[0].mxu0
    %v462 = vadd.f32 0.0, %v461
    %v463 = vpop.f32.mrb[0].mxu0
    %v464 = vpop.f32.mrb[0].mxu0
    %465 = vdwg.mxu0
    %466 = vmatprep.subr.bf16.mxu0 0
    %467 = vmatpush1.bf16.msra.mxu0 %v379
    %468 = vmatprep.subr.bf16.mxu0 0
    %469 = vmatpush1.bf16.msra.mxu0 %v382
    %470 = vmatprep.subr.bf16.mxu0 0
    %471 = vmatpush1.bf16.msra.mxu0 %v385
    %472 = vmatprep.subr.bf16.mxu0 0
    %473 = vmatpush1.bf16.msra.mxu0 %v388
    %474 = vmatprep.subr.bf16.mxu0 0
    %475 = vmatpush1.bf16.msra.mxu0 %v391
    %476 = vmatprep.subr.bf16.mxu0 0
    %477 = vmatpush1.bf16.msra.mxu0 %v394
    %478 = vmatprep.subr.bf16.mxu0 0
    %479 = vmatpush1.bf16.msra.mxu0 %v397
    %480 = vmatprep.subr.bf16.mxu0 0
    %481 = vmatpush1.bf16.msra.mxu0 %v400
    %482 = vmatprep.subr.bf16.mxu0 0
    %483 = vmatpush1.bf16.msra.mxu0 0
    %484 = vmatprep.subr.bf16.mxu0 0
    %485 = vmatpush1.bf16.msra.mxu0 0
    %486 = vmatprep.subr.bf16.mxu0 0
    %487 = vmatpush1.bf16.msra.mxu0 0
    %488 = vmatprep.subr.bf16.mxu0 0
    %489 = vmatpush1.bf16.msra.mxu0 0
    %490 = vmatprep.subr.bf16.mxu0 0
    %491 = vmatpush1.bf16.msra.mxu0 0
    %492 = vmatprep.subr.bf16.mxu0 0
    %493 = vmatpush1.bf16.msra.mxu0 0
    %494 = vmatprep.subr.bf16.mxu0 0
    %495 = vmatpush1.bf16.msra.mxu0 0
    %496 = vmatprep.subr.bf16.mxu0 0
    %497 = vmatpush1.bf16.msra.mxu0 0
    %498 = vmatprep.mubr.bf16.mxu0 0
    %499 = vmatmul.mubr.bf16.gmra.mrb[0].mxu0 %v312
    %v500 = vpop.f32.mrb[0].mxu0
    %v501 = vadd.f32 0.0, %v500
    %v502 = vpop.f32.mrb[0].mxu0
    %v503 = vpop.f32.mrb[0].mxu0
    %v504 = vpop.f32.mrb[0].mxu0
    %505 = vdwg.mxu0
    %v506 = vadd.f32 %v266, %v460
    %v507 = vadd.f32 %v268, %v462
    %v509 = vlaneseq
    %v510 = vshrl.u32 %v509, 7
    %v511 = vsub.s32 0, %v510
    %v512 = vrot.slane %v100, %v511
    %v513 = vlaneseq
    %v514 = vshrl.u32 %v513, 7
    %v515 = vsub.s32 1, %v514
    %v516 = vrot.slane %v100, %v515
    %v519 = vadd.f32 %v506, %v512
    %v520 = vadd.f32 %v507, %v516
    %v521 = vxor.u32 %v519, 2147483648
    %v522 = vxor.u32 %v520, 2147483648
    %v523 = vmul.f32 %v521, 1.442695
    %v524 = vpow.pop %v523
    %v525 = vmul.f32 %v522, 1.442695
    %v526 = vpow.pop %v525
    %v527 = vadd.f32 %v524, 1.0
    %v528 = vadd.f32 %v526, 1.0
    %v529 = vrcp.pop %v527
    %v530 = vmul.f32 1.0, %v529
    %v531 = vrcp.pop %v528
    %v532 = vmul.f32 1.0, %v531
    %v533 = vadd.f32 %v307, %v101
    %v534 = vadd.f32 %v501, %v102
    %v535 = vmul.f32 %v530, %v534
    %v536 = vadd.f32 %v533, %v535
    %v537 = vtanh.pop %v536
    %v538 = vsub.f32 1.0, %v532
    %v539 = vmul.f32 %v538, %v537
    %v540 = vmul.f32 %v532, %v51
    %v541 = vadd.f32 %v539, %v540
    %v542 = vpack.c.bf16 %v541, %v541
    %543 = vmatprep.subr.bf16.mxu0 %v184
    %544 = vmatpush1.bf16.msra.mxu0 %v183
    %545 = vmatprep.subr.bf16.mxu0 %v187
    %546 = vmatpush1.bf16.msra.mxu0 %v186
    %547 = vmatprep.subr.bf16.mxu0 %v190
    %548 = vmatpush1.bf16.msra.mxu0 %v189
    %549 = vmatprep.subr.bf16.mxu0 %v193
    %550 = vmatpush1.bf16.msra.mxu0 %v192
    %551 = vmatprep.subr.bf16.mxu0 %v196
    %552 = vmatpush1.bf16.msra.mxu0 %v195
    %553 = vmatprep.subr.bf16.mxu0 %v199
    %554 = vmatpush1.bf16.msra.mxu0 %v198
    %555 = vmatprep.subr.bf16.mxu0 %v202
    %556 = vmatpush1.bf16.msra.mxu0 %v201
    %557 = vmatprep.subr.bf16.mxu0 %v205
    %558 = vmatpush1.bf16.msra.mxu0 %v204
    %559 = vmatprep.subr.bf16.mxu0 0
    %560 = vmatpush1.bf16.msra.mxu0 0
    %561 = vmatprep.subr.bf16.mxu0 0
    %562 = vmatpush1.bf16.msra.mxu0 0
    %563 = vmatprep.subr.bf16.mxu0 0
    %564 = vmatpush1.bf16.msra.mxu0 0
    %565 = vmatprep.subr.bf16.mxu0 0
    %566 = vmatpush1.bf16.msra.mxu0 0
    %567 = vmatprep.subr.bf16.mxu0 0
    %568 = vmatpush1.bf16.msra.mxu0 0
    %569 = vmatprep.subr.bf16.mxu0 0
    %570 = vmatpush1.bf16.msra.mxu0 0
    %571 = vmatprep.subr.bf16.mxu0 0
    %572 = vmatpush1.bf16.msra.mxu0 0
    %573 = vmatprep.subr.bf16.mxu0 0
    %574 = vmatpush1.bf16.msra.mxu0 0
    %575 = vmatprep.mubr.bf16.mxu0 0
    %576 = vmatmul.mubr.bf16.gmra.mrb[0].mxu0 %v542
    %v577 = vpop.f32.mrb[0].mxu0
    %v578 = vadd.f32 0.0, %v577
    %v579 = vpop.f32.mrb[0].mxu0
    %v580 = vadd.f32 0.0, %v579
    %v581 = vpop.f32.mrb[0].mxu0
    %v582 = vpop.f32.mrb[0].mxu0
    %583 = vdwg.mxu0
    %584 = vmatprep.subr.bf16.mxu0 %v377
    %585 = vmatpush1.bf16.msra.mxu0 %v185
    %586 = vmatprep.subr.bf16.mxu0 %v380
    %587 = vmatpush1.bf16.msra.mxu0 %v188
    %588 = vmatprep.subr.bf16.mxu0 %v383
    %589 = vmatpush1.bf16.msra.mxu0 %v191
    %590 = vmatprep.subr.bf16.mxu0 %v386
    %591 = vmatpush1.bf16.msra.mxu0 %v194
    %592 = vmatprep.subr.bf16.mxu0 %v389
    %593 = vmatpush1.bf16.msra.mxu0 %v197
    %594 = vmatprep.subr.bf16.mxu0 %v392
    %595 = vmatpush1.bf16.msra.mxu0 %v200
    %596 = vmatprep.subr.bf16.mxu0 %v395
    %597 = vmatpush1.bf16.msra.mxu0 %v203
    %598 = vmatprep.subr.bf16.mxu0 %v398
    %599 = vmatpush1.bf16.msra.mxu0 %v206
    %600 = vmatprep.subr.bf16.mxu0 0
    %601 = vmatpush1.bf16.msra.mxu0 0
    %602 = vmatprep.subr.bf16.mxu0 0
    %603 = vmatpush1.bf16.msra.mxu0 0
    %604 = vmatprep.subr.bf16.mxu0 0
    %605 = vmatpush1.bf16.msra.mxu0 0
    %606 = vmatprep.subr.bf16.mxu0 0
    %607 = vmatpush1.bf16.msra.mxu0 0
    %608 = vmatprep.subr.bf16.mxu0 0
    %609 = vmatpush1.bf16.msra.mxu0 0
    %610 = vmatprep.subr.bf16.mxu0 0
    %611 = vmatpush1.bf16.msra.mxu0 0
    %612 = vmatprep.subr.bf16.mxu0 0
    %613 = vmatpush1.bf16.msra.mxu0 0
    %614 = vmatprep.subr.bf16.mxu0 0
    %615 = vmatpush1.bf16.msra.mxu0 0
    %616 = vmatprep.mubr.bf16.mxu0 0
    %617 = vmatmul.mubr.bf16.gmra.mrb[0].mxu0 %v542
    %v618 = vpop.f32.mrb[0].mxu0
    %v619 = vadd.f32 0.0, %v618
    %v620 = vpop.f32.mrb[0].mxu0
    %v621 = vadd.f32 0.0, %v620
    %v622 = vpop.f32.mrb[0].mxu0
    %v623 = vpop.f32.mrb[0].mxu0
    %624 = vdwg.mxu0
    %625 = vmatprep.subr.bf16.mxu0 %v379
    %626 = vmatpush1.bf16.msra.mxu0 %v378
    %627 = vmatprep.subr.bf16.mxu0 %v382
    %628 = vmatpush1.bf16.msra.mxu0 %v381
    %629 = vmatprep.subr.bf16.mxu0 %v385
    %630 = vmatpush1.bf16.msra.mxu0 %v384
    %631 = vmatprep.subr.bf16.mxu0 %v388
    %632 = vmatpush1.bf16.msra.mxu0 %v387
    %633 = vmatprep.subr.bf16.mxu0 %v391
    %634 = vmatpush1.bf16.msra.mxu0 %v390
    %635 = vmatprep.subr.bf16.mxu0 %v394
    %636 = vmatpush1.bf16.msra.mxu0 %v393
    %637 = vmatprep.subr.bf16.mxu0 %v397
    %638 = vmatpush1.bf16.msra.mxu0 %v396
    %639 = vmatprep.subr.bf16.mxu0 %v400
    %640 = vmatpush1.bf16.msra.mxu0 %v399
    %641 = vmatprep.subr.bf16.mxu0 0
    %642 = vmatpush1.bf16.msra.mxu0 0
    %643 = vmatprep.subr.bf16.mxu0 0
    %644 = vmatpush1.bf16.msra.mxu0 0
    %645 = vmatprep.subr.bf16.mxu0 0
    %646 = vmatpush1.bf16.msra.mxu0 0
    %647 = vmatprep.subr.bf16.mxu0 0
    %648 = vmatpush1.bf16.msra.mxu0 0
    %649 = vmatprep.subr.bf16.mxu0 0
    %650 = vmatpush1.bf16.msra.mxu0 0
    %651 = vmatprep.subr.bf16.mxu0 0
    %652 = vmatpush1.bf16.msra.mxu0 0
    %653 = vmatprep.subr.bf16.mxu0 0
    %654 = vmatpush1.bf16.msra.mxu0 0
    %655 = vmatprep.subr.bf16.mxu0 0
    %656 = vmatpush1.bf16.msra.mxu0 0
    %657 = vmatprep.mubr.bf16.mxu0 0
    %658 = vmatmul.mubr.bf16.gmra.mrb[0].mxu0 %v542
    %v659 = vpop.f32.mrb[0].mxu0
    %v660 = vadd.f32 0.0, %v659
    %v661 = vpop.f32.mrb[0].mxu0
    %v662 = vadd.f32 0.0, %v661
    %v663 = vpop.f32.mrb[0].mxu0
    %v664 = vpop.f32.mrb[0].mxu0
    %665 = vdwg.mxu0
    %v666 = vadd.f32 %v578, %v621
    %v667 = vadd.f32 %v580, %v660
    %v668 = vadd.f32 %v666, %v512
    %v669 = vadd.f32 %v667, %v516
    %v670 = vxor.u32 %v668, 2147483648
    %v671 = vxor.u32 %v669, 2147483648
    %v672 = vmul.f32 %v670, 1.442695
    %v673 = vpow.pop %v672
    %v674 = vmul.f32 %v671, 1.442695
    %v675 = vpow.pop %v674
    %v676 = vadd.f32 %v673, 1.0
    %v677 = vadd.f32 %v675, 1.0
    %v678 = vrcp.pop %v676
    %v679 = vmul.f32 1.0, %v678
    %v680 = vrcp.pop %v677
    %v681 = vmul.f32 1.0, %v680
    %v682 = vadd.f32 %v619, %v101
    %v683 = vadd.f32 %v662, %v102
    %v684 = vmul.f32 %v679, %v683
    %v685 = vadd.f32 %v682, %v684
    %v686 = vtanh.pop %v685
    %v687 = vsub.f32 1.0, %v681
    %v688 = vmul.f32 %v687, %v686
    %v689 = vmul.f32 %v681, %v541
    %v690 = vadd.f32 %v688, %v689
    %v691 = vpack.c.bf16 %v690, %v690
    %692 = vmatprep.subr.bf16.mxu0 %v184
    %693 = vmatpush1.bf16.msra.mxu0 %v183
    %694 = vmatprep.subr.bf16.mxu0 %v187
    %695 = vmatpush1.bf16.msra.mxu0 %v186
    %696 = vmatprep.subr.bf16.mxu0 %v190
    %697 = vmatpush1.bf16.msra.mxu0 %v189
    %698 = vmatprep.subr.bf16.mxu0 %v193
    %699 = vmatpush1.bf16.msra.mxu0 %v192
    %700 = vmatprep.subr.bf16.mxu0 %v196
    %701 = vmatpush1.bf16.msra.mxu0 %v195
    %702 = vmatprep.subr.bf16.mxu0 %v199
    %703 = vmatpush1.bf16.msra.mxu0 %v198
    %704 = vmatprep.subr.bf16.mxu0 %v202
    %705 = vmatpush1.bf16.msra.mxu0 %v201
    %706 = vmatprep.subr.bf16.mxu0 %v205
    %707 = vmatpush1.bf16.msra.mxu0 %v204
    %708 = vmatprep.subr.bf16.mxu0 0
    %709 = vmatpush1.bf16.msra.mxu0 0
    %710 = vmatprep.subr.bf16.mxu0 0
    %711 = vmatpush1.bf16.msra.mxu0 0
    %712 = vmatprep.subr.bf16.mxu0 0
    %713 = vmatpush1.bf16.msra.mxu0 0
    %714 = vmatprep.subr.bf16.mxu0 0
    %715 = vmatpush1.bf16.msra.mxu0 0
    %716 = vmatprep.subr.bf16.mxu0 0
    %717 = vmatpush1.bf16.msra.mxu0 0
    %718 = vmatprep.subr.bf16.mxu0 0
    %719 = vmatpush1.bf16.msra.mxu0 0
    %720 = vmatprep.subr.bf16.mxu0 0
    %721 = vmatpush1.bf16.msra.mxu0 0
    %722 = vmatprep.subr.bf16.mxu0 0
    %723 = vmatpush1.bf16.msra.mxu0 0
    %724 = vmatprep.mubr.bf16.mxu0 0
    %725 = vmatmul.mubr.bf16.gmra.mrb[0].mxu0 %v691
    %v726 = vpop.f32.mrb[0].mxu0
    %v727 = vadd.f32 0.0, %v726
    %v728 = vpop.f32.mrb[0].mxu0
    %v729 = vadd.f32 0.0, %v728
    %v730 = vpop.f32.mrb[0].mxu0
    %v731 = vpop.f32.mrb[0].mxu0
    %732 = vdwg.mxu0
    %733 = vmatprep.subr.bf16.mxu0 %v377
    %734 = vmatpush1.bf16.msra.mxu0 %v185
    %735 = vmatprep.subr.bf16.mxu0 %v380
    %736 = vmatpush1.bf16.msra.mxu0 %v188
    %737 = vmatprep.subr.bf16.mxu0 %v383
    %738 = vmatpush1.bf16.msra.mxu0 %v191
    %739 = vmatprep.subr.bf16.mxu0 %v386
    %740 = vmatpush1.bf16.msra.mxu0 %v194
    %741 = vmatprep.subr.bf16.mxu0 %v389
    %742 = vmatpush1.bf16.msra.mxu0 %v197
    %743 = vmatprep.subr.bf16.mxu0 %v392
    %744 = vmatpush1.bf16.msra.mxu0 %v200
    %745 = vmatprep.subr.bf16.mxu0 %v395
    %746 = vmatpush1.bf16.msra.mxu0 %v203
    %747 = vmatprep.subr.bf16.mxu0 %v398
    %748 = vmatpush1.bf16.msra.mxu0 %v206
    %749 = vmatprep.subr.bf16.mxu0 0
    %750 = vmatpush1.bf16.msra.mxu0 0
    %751 = vmatprep.subr.bf16.mxu0 0
    %752 = vmatpush1.bf16.msra.mxu0 0
    %753 = vmatprep.subr.bf16.mxu0 0
    %754 = vmatpush1.bf16.msra.mxu0 0
    %755 = vmatprep.subr.bf16.mxu0 0
    %756 = vmatpush1.bf16.msra.mxu0 0
    %757 = vmatprep.subr.bf16.mxu0 0
    %758 = vmatpush1.bf16.msra.mxu0 0
    %759 = vmatprep.subr.bf16.mxu0 0
    %760 = vmatpush1.bf16.msra.mxu0 0
    %761 = vmatprep.subr.bf16.mxu0 0
    %762 = vmatpush1.bf16.msra.mxu0 0
    %763 = vmatprep.subr.bf16.mxu0 0
    %764 = vmatpush1.bf16.msra.mxu0 0
    %765 = vmatprep.mubr.bf16.mxu0 0
    %766 = vmatmul.mubr.bf16.gmra.mrb[0].mxu0 %v691
    %v767 = vpop.f32.mrb[0].mxu0
    %v768 = vadd.f32 0.0, %v767
    %v769 = vpop.f32.mrb[0].mxu0
    %v770 = vadd.f32 0.0, %v769
    %v771 = vpop.f32.mrb[0].mxu0
    %v772 = vpop.f32.mrb[0].mxu0
    %773 = vdwg.mxu0
    %774 = vmatprep.subr.bf16.mxu0 %v379
    %775 = vmatpush1.bf16.msra.mxu0 %v378
    %776 = vmatprep.subr.bf16.mxu0 %v382
    %777 = vmatpush1.bf16.msra.mxu0 %v381
    %778 = vmatprep.subr.bf16.mxu0 %v385
    %779 = vmatpush1.bf16.msra.mxu0 %v384
    %780 = vmatprep.subr.bf16.mxu0 %v388
    %781 = vmatpush1.bf16.msra.mxu0 %v387
    %782 = vmatprep.subr.bf16.mxu0 %v391
    %783 = vmatpush1.bf16.msra.mxu0 %v390
    %784 = vmatprep.subr.bf16.mxu0 %v394
    %785 = vmatpush1.bf16.msra.mxu0 %v393
    %786 = vmatprep.subr.bf16.mxu0 %v397
    %787 = vmatpush1.bf16.msra.mxu0 %v396
    %788 = vmatprep.subr.bf16.mxu0 %v400
    %789 = vmatpush1.bf16.msra.mxu0 %v399
    %790 = vmatprep.subr.bf16.mxu0 0
    %791 = vmatpush1.bf16.msra.mxu0 0
    %792 = vmatprep.subr.bf16.mxu0 0
    %793 = vmatpush1.bf16.msra.mxu0 0
    %794 = vmatprep.subr.bf16.mxu0 0
    %795 = vmatpush1.bf16.msra.mxu0 0
    %796 = vmatprep.subr.bf16.mxu0 0
    %797 = vmatpush1.bf16.msra.mxu0 0
    %798 = vmatprep.subr.bf16.mxu0 0
    %799 = vmatpush1.bf16.msra.mxu0 0
    %800 = vmatprep.subr.bf16.mxu0 0
    %801 = vmatpush1.bf16.msra.mxu0 0
    %802 = vmatprep.subr.bf16.mxu0 0
    %803 = vmatpush1.bf16.msra.mxu0 0
    %804 = vmatprep.subr.bf16.mxu0 0
    %805 = vmatpush1.bf16.msra.mxu0 0
    %806 = vmatprep.mubr.bf16.mxu0 0
    %807 = vmatmul.mubr.bf16.gmra.mrb[0].mxu0 %v691
    %v808 = vpop.f32.mrb[0].mxu0
    %v809 = vadd.f32 0.0, %v808
    %v810 = vpop.f32.mrb[0].mxu0
    %v811 = vadd.f32 0.0, %v810
    %v812 = vpop.f32.mrb[0].mxu0
    %v813 = vpop.f32.mrb[0].mxu0
    %814 = vdwg.mxu0
    %v815 = vadd.f32 %v727, %v770
    %v816 = vadd.f32 %v729, %v809
    %v817 = vadd.f32 %v815, %v512
    %v818 = vadd.f32 %v816, %v516
    %v819 = vxor.u32 %v817, 2147483648
    %v820 = vxor.u32 %v818, 2147483648
    %v821 = vmul.f32 %v819, 1.442695
    %v822 = vpow.pop %v821
    %v823 = vmul.f32 %v820, 1.442695
    %v824 = vpow.pop %v823
    %v825 = vadd.f32 %v822, 1.0
    %v826 = vadd.f32 %v824, 1.0
    %v827 = vrcp.pop %v825
    %v828 = vmul.f32 1.0, %v827
    %v829 = vrcp.pop %v826
    %v830 = vmul.f32 1.0, %v829
    %v831 = vadd.f32 %v768, %v101
    %v832 = vadd.f32 %v811, %v102
    %v833 = vmul.f32 %v828, %v832
    %v834 = vadd.f32 %v831, %v833
    %v835 = vtanh.pop %v834
    %v836 = vsub.f32 1.0, %v830
    %v837 = vmul.f32 %v836, %v835
    %v838 = vmul.f32 %v830, %v690
    %v839 = vadd.f32 %v837, %v838
    %v840 = vpack.c.bf16 %v839, %v839
    %841 = vmatprep.subr.bf16.mxu0 %v184
    %842 = vmatpush1.bf16.msra.mxu0 %v183
    %843 = vmatprep.subr.bf16.mxu0 %v187
    %844 = vmatpush1.bf16.msra.mxu0 %v186
    %845 = vmatprep.subr.bf16.mxu0 %v190
    %846 = vmatpush1.bf16.msra.mxu0 %v189
    %847 = vmatprep.subr.bf16.mxu0 %v193
    %848 = vmatpush1.bf16.msra.mxu0 %v192
    %849 = vmatprep.subr.bf16.mxu0 %v196
    %850 = vmatpush1.bf16.msra.mxu0 %v195
    %851 = vmatprep.subr.bf16.mxu0 %v199
    %852 = vmatpush1.bf16.msra.mxu0 %v198
    %853 = vmatprep.subr.bf16.mxu0 %v202
    %854 = vmatpush1.bf16.msra.mxu0 %v201
    %855 = vmatprep.subr.bf16.mxu0 %v205
    %856 = vmatpush1.bf16.msra.mxu0 %v204
    %857 = vmatprep.subr.bf16.mxu0 0
    %858 = vmatpush1.bf16.msra.mxu0 0
    %859 = vmatprep.subr.bf16.mxu0 0
    %860 = vmatpush1.bf16.msra.mxu0 0
    %861 = vmatprep.subr.bf16.mxu0 0
    %862 = vmatpush1.bf16.msra.mxu0 0
    %863 = vmatprep.subr.bf16.mxu0 0
    %864 = vmatpush1.bf16.msra.mxu0 0
    %865 = vmatprep.subr.bf16.mxu0 0
    %866 = vmatpush1.bf16.msra.mxu0 0
    %867 = vmatprep.subr.bf16.mxu0 0
    %868 = vmatpush1.bf16.msra.mxu0 0
    %869 = vmatprep.subr.bf16.mxu0 0
    %870 = vmatpush1.bf16.msra.mxu0 0
    %871 = vmatprep.subr.bf16.mxu0 0
    %872 = vmatpush1.bf16.msra.mxu0 0
    %873 = vmatprep.mubr.bf16.mxu0 0
    %874 = vmatmul.mubr.bf16.gmra.mrb[0].mxu0 %v840
    %v875 = vpop.f32.mrb[0].mxu0
    %v876 = vadd.f32 0.0, %v875
    %v877 = vpop.f32.mrb[0].mxu0
    %v878 = vadd.f32 0.0, %v877
    %v879 = vpop.f32.mrb[0].mxu0
    %v880 = vpop.f32.mrb[0].mxu0
    %881 = vdwg.mxu0
    %882 = vmatprep.subr.bf16.mxu0 %v377
    %883 = vmatpush1.bf16.msra.mxu0 %v185
    %884 = vmatprep.subr.bf16.mxu0 %v380
    %885 = vmatpush1.bf16.msra.mxu0 %v188
    %886 = vmatprep.subr.bf16.mxu0 %v383
    %887 = vmatpush1.bf16.msra.mxu0 %v191
    %888 = vmatprep.subr.bf16.mxu0 %v386
    %889 = vmatpush1.bf16.msra.mxu0 %v194
    %890 = vmatprep.subr.bf16.mxu0 %v389
    %891 = vmatpush1.bf16.msra.mxu0 %v197
    %892 = vmatprep.subr.bf16.mxu0 %v392
    %893 = vmatpush1.bf16.msra.mxu0 %v200
    %894 = vmatprep.subr.bf16.mxu0 %v395
    %895 = vmatpush1.bf16.msra.mxu0 %v203
    %896 = vmatprep.subr.bf16.mxu0 %v398
    %897 = vmatpush1.bf16.msra.mxu0 %v206
    %898 = vmatprep.subr.bf16.mxu0 0
    %899 = vmatpush1.bf16.msra.mxu0 0
    %900 = vmatprep.subr.bf16.mxu0 0
    %901 = vmatpush1.bf16.msra.mxu0 0
    %902 = vmatprep.subr.bf16.mxu0 0
    %903 = vmatpush1.bf16.msra.mxu0 0
    %904 = vmatprep.subr.bf16.mxu0 0
    %905 = vmatpush1.bf16.msra.mxu0 0
    %906 = vmatprep.subr.bf16.mxu0 0
    %907 = vmatpush1.bf16.msra.mxu0 0
    %908 = vmatprep.subr.bf16.mxu0 0
    %909 = vmatpush1.bf16.msra.mxu0 0
    %910 = vmatprep.subr.bf16.mxu0 0
    %911 = vmatpush1.bf16.msra.mxu0 0
    %912 = vmatprep.subr.bf16.mxu0 0
    %913 = vmatpush1.bf16.msra.mxu0 0
    %914 = vmatprep.mubr.bf16.mxu0 0
    %915 = vmatmul.mubr.bf16.gmra.mrb[0].mxu0 %v840
    %v916 = vpop.f32.mrb[0].mxu0
    %v917 = vadd.f32 0.0, %v916
    %v918 = vpop.f32.mrb[0].mxu0
    %v919 = vadd.f32 0.0, %v918
    %v920 = vpop.f32.mrb[0].mxu0
    %v921 = vpop.f32.mrb[0].mxu0
    %922 = vdwg.mxu0
    %923 = vmatprep.subr.bf16.mxu0 %v379
    %924 = vmatpush1.bf16.msra.mxu0 %v378
    %925 = vmatprep.subr.bf16.mxu0 %v382
    %926 = vmatpush1.bf16.msra.mxu0 %v381
    %927 = vmatprep.subr.bf16.mxu0 %v385
    %928 = vmatpush1.bf16.msra.mxu0 %v384
    %929 = vmatprep.subr.bf16.mxu0 %v388
    %930 = vmatpush1.bf16.msra.mxu0 %v387
    %931 = vmatprep.subr.bf16.mxu0 %v391
    %932 = vmatpush1.bf16.msra.mxu0 %v390
    %933 = vmatprep.subr.bf16.mxu0 %v394
    %934 = vmatpush1.bf16.msra.mxu0 %v393
    %935 = vmatprep.subr.bf16.mxu0 %v397
    %936 = vmatpush1.bf16.msra.mxu0 %v396
    %937 = vmatprep.subr.bf16.mxu0 %v400
    %938 = vmatpush1.bf16.msra.mxu0 %v399
    %939 = vmatprep.subr.bf16.mxu0 0
    %940 = vmatpush1.bf16.msra.mxu0 0
    %941 = vmatprep.subr.bf16.mxu0 0
    %942 = vmatpush1.bf16.msra.mxu0 0
    %943 = vmatprep.subr.bf16.mxu0 0
    %944 = vmatpush1.bf16.msra.mxu0 0
    %945 = vmatprep.subr.bf16.mxu0 0
    %946 = vmatpush1.bf16.msra.mxu0 0
    %947 = vmatprep.subr.bf16.mxu0 0
    %948 = vmatpush1.bf16.msra.mxu0 0
    %949 = vmatprep.subr.bf16.mxu0 0
    %950 = vmatpush1.bf16.msra.mxu0 0
    %951 = vmatprep.subr.bf16.mxu0 0
    %952 = vmatpush1.bf16.msra.mxu0 0
    %953 = vmatprep.subr.bf16.mxu0 0
    %954 = vmatpush1.bf16.msra.mxu0 0
    %955 = vmatprep.mubr.bf16.mxu0 0
    %956 = vmatmul.mubr.bf16.gmra.mrb[0].mxu0 %v840
    %v957 = vpop.f32.mrb[0].mxu0
    %v958 = vadd.f32 0.0, %v957
    %v959 = vpop.f32.mrb[0].mxu0
    %v960 = vadd.f32 0.0, %v959
    %v961 = vpop.f32.mrb[0].mxu0
    %v962 = vpop.f32.mrb[0].mxu0
    %963 = vdwg.mxu0
    %v964 = vadd.f32 %v876, %v919
    %v965 = vadd.f32 %v878, %v958
    %v966 = vadd.f32 %v964, %v512
    %v967 = vadd.f32 %v965, %v516
    %v968 = vxor.u32 %v966, 2147483648
    %v969 = vxor.u32 %v967, 2147483648
    %v970 = vmul.f32 %v968, 1.442695
    %v971 = vpow.pop %v970
    %v972 = vmul.f32 %v969, 1.442695
    %v973 = vpow.pop %v972
    %v974 = vadd.f32 %v971, 1.0
    %v975 = vadd.f32 %v973, 1.0
    %v976 = vrcp.pop %v974
    %v977 = vmul.f32 1.0, %v976
    %v978 = vrcp.pop %v975
    %v979 = vmul.f32 1.0, %v978
    %v980 = vadd.f32 %v917, %v101
    %v981 = vadd.f32 %v960, %v102
    %v982 = vmul.f32 %v977, %v981
    %v983 = vadd.f32 %v980, %v982
    %v984 = vtanh.pop %v983
    %v985 = vsub.f32 1.0, %v979
    %v986 = vmul.f32 %v985, %v984
    %v987 = vmul.f32 %v979, %v839
    %v988 = vadd.f32 %v986, %v987
    %v989 = vpack.c.bf16 %v988, %v988
    %990 = vmatprep.subr.bf16.mxu0 %v184
    %991 = vmatpush1.bf16.msra.mxu0 %v183
    %992 = vmatprep.subr.bf16.mxu0 %v187
    %993 = vmatpush1.bf16.msra.mxu0 %v186
    %994 = vmatprep.subr.bf16.mxu0 %v190
    %995 = vmatpush1.bf16.msra.mxu0 %v189
    %996 = vmatprep.subr.bf16.mxu0 %v193
    %997 = vmatpush1.bf16.msra.mxu0 %v192
    %998 = vmatprep.subr.bf16.mxu0 %v196
    %999 = vmatpush1.bf16.msra.mxu0 %v195
    %1000 = vmatprep.subr.bf16.mxu0 %v199
    %1001 = vmatpush1.bf16.msra.mxu0 %v198
    %1002 = vmatprep.subr.bf16.mxu0 %v202
    %1003 = vmatpush1.bf16.msra.mxu0 %v201
    %1004 = vmatprep.subr.bf16.mxu0 %v205
    %1005 = vmatpush1.bf16.msra.mxu0 %v204
    %1006 = vmatprep.subr.bf16.mxu0 0
    %1007 = vmatpush1.bf16.msra.mxu0 0
    %1008 = vmatprep.subr.bf16.mxu0 0
    %1009 = vmatpush1.bf16.msra.mxu0 0
    %1010 = vmatprep.subr.bf16.mxu0 0
    %1011 = vmatpush1.bf16.msra.mxu0 0
    %1012 = vmatprep.subr.bf16.mxu0 0
    %1013 = vmatpush1.bf16.msra.mxu0 0
    %1014 = vmatprep.subr.bf16.mxu0 0
    %1015 = vmatpush1.bf16.msra.mxu0 0
    %1016 = vmatprep.subr.bf16.mxu0 0
    %1017 = vmatpush1.bf16.msra.mxu0 0
    %1018 = vmatprep.subr.bf16.mxu0 0
    %1019 = vmatpush1.bf16.msra.mxu0 0
    %1020 = vmatprep.subr.bf16.mxu0 0
    %1021 = vmatpush1.bf16.msra.mxu0 0
    %1022 = vmatprep.mubr.bf16.mxu0 0
    %1023 = vmatmul.mubr.bf16.gmra.mrb[0].mxu0 %v989
    %v1024 = vpop.f32.mrb[0].mxu0
    %v1025 = vadd.f32 0.0, %v1024
    %v1026 = vpop.f32.mrb[0].mxu0
    %v1027 = vadd.f32 0.0, %v1026
    %v1028 = vpop.f32.mrb[0].mxu0
    %v1029 = vpop.f32.mrb[0].mxu0
    %1030 = vdwg.mxu0
    %1031 = vmatprep.subr.bf16.mxu0 %v377
    %1032 = vmatpush1.bf16.msra.mxu0 %v185
    %1033 = vmatprep.subr.bf16.mxu0 %v380
    %1034 = vmatpush1.bf16.msra.mxu0 %v188
    %1035 = vmatprep.subr.bf16.mxu0 %v383
    %1036 = vmatpush1.bf16.msra.mxu0 %v191
    %1037 = vmatprep.subr.bf16.mxu0 %v386
    %1038 = vmatpush1.bf16.msra.mxu0 %v194
    %1039 = vmatprep.subr.bf16.mxu0 %v389
    %1040 = vmatpush1.bf16.msra.mxu0 %v197
    %1041 = vmatprep.subr.bf16.mxu0 %v392
    %1042 = vmatpush1.bf16.msra.mxu0 %v200
    %1043 = vmatprep.subr.bf16.mxu0 %v395
    %1044 = vmatpush1.bf16.msra.mxu0 %v203
    %1045 = vmatprep.subr.bf16.mxu0 %v398
    %1046 = vmatpush1.bf16.msra.mxu0 %v206
    %1047 = vmatprep.subr.bf16.mxu0 0
    %1048 = vmatpush1.bf16.msra.mxu0 0
    %1049 = vmatprep.subr.bf16.mxu0 0
    %1050 = vmatpush1.bf16.msra.mxu0 0
    %1051 = vmatprep.subr.bf16.mxu0 0
    %1052 = vmatpush1.bf16.msra.mxu0 0
    %1053 = vmatprep.subr.bf16.mxu0 0
    %1054 = vmatpush1.bf16.msra.mxu0 0
    %1055 = vmatprep.subr.bf16.mxu0 0
    %1056 = vmatpush1.bf16.msra.mxu0 0
    %1057 = vmatprep.subr.bf16.mxu0 0
    %1058 = vmatpush1.bf16.msra.mxu0 0
    %1059 = vmatprep.subr.bf16.mxu0 0
    %1060 = vmatpush1.bf16.msra.mxu0 0
    %1061 = vmatprep.subr.bf16.mxu0 0
    %1062 = vmatpush1.bf16.msra.mxu0 0
    %1063 = vmatprep.mubr.bf16.mxu0 0
    %1064 = vmatmul.mubr.bf16.gmra.mrb[0].mxu0 %v989
    %v1065 = vpop.f32.mrb[0].mxu0
    %v1066 = vadd.f32 0.0, %v1065
    %v1067 = vpop.f32.mrb[0].mxu0
    %v1068 = vadd.f32 0.0, %v1067
    %v1069 = vpop.f32.mrb[0].mxu0
    %v1070 = vpop.f32.mrb[0].mxu0
    %1071 = vdwg.mxu0
    %1072 = vmatprep.subr.bf16.mxu0 %v379
    %1073 = vmatpush1.bf16.msra.mxu0 %v378
    %1074 = vmatprep.subr.bf16.mxu0 %v382
    %1075 = vmatpush1.bf16.msra.mxu0 %v381
    %1076 = vmatprep.subr.bf16.mxu0 %v385
    %1077 = vmatpush1.bf16.msra.mxu0 %v384
    %1078 = vmatprep.subr.bf16.mxu0 %v388
    %1079 = vmatpush1.bf16.msra.mxu0 %v387
    %1080 = vmatprep.subr.bf16.mxu0 %v391
    %1081 = vmatpush1.bf16.msra.mxu0 %v390
    %1082 = vmatprep.subr.bf16.mxu0 %v394
    %1083 = vmatpush1.bf16.msra.mxu0 %v393
    %1084 = vmatprep.subr.bf16.mxu0 %v397
    %1085 = vmatpush1.bf16.msra.mxu0 %v396
    %1086 = vmatprep.subr.bf16.mxu0 %v400
    %1087 = vmatpush1.bf16.msra.mxu0 %v399
    %1088 = vmatprep.subr.bf16.mxu0 0
    %1089 = vmatpush1.bf16.msra.mxu0 0
    %1090 = vmatprep.subr.bf16.mxu0 0
    %1091 = vmatpush1.bf16.msra.mxu0 0
    %1092 = vmatprep.subr.bf16.mxu0 0
    %1093 = vmatpush1.bf16.msra.mxu0 0
    %1094 = vmatprep.subr.bf16.mxu0 0
    %1095 = vmatpush1.bf16.msra.mxu0 0
    %1096 = vmatprep.subr.bf16.mxu0 0
    %1097 = vmatpush1.bf16.msra.mxu0 0
    %1098 = vmatprep.subr.bf16.mxu0 0
    %1099 = vmatpush1.bf16.msra.mxu0 0
    %1100 = vmatprep.subr.bf16.mxu0 0
    %1101 = vmatpush1.bf16.msra.mxu0 0
    %1102 = vmatprep.subr.bf16.mxu0 0
    %1103 = vmatpush1.bf16.msra.mxu0 0
    %1104 = vmatprep.mubr.bf16.mxu0 0
    %1105 = vmatmul.mubr.bf16.gmra.mrb[0].mxu0 %v989
    %v1106 = vpop.f32.mrb[0].mxu0
    %v1107 = vadd.f32 0.0, %v1106
    %v1108 = vpop.f32.mrb[0].mxu0
    %v1109 = vadd.f32 0.0, %v1108
    %v1110 = vpop.f32.mrb[0].mxu0
    %v1111 = vpop.f32.mrb[0].mxu0
    %1112 = vdwg.mxu0
    %v1113 = vadd.f32 %v1025, %v1068
    %v1114 = vadd.f32 %v1027, %v1107
    %v1115 = vadd.f32 %v1113, %v512
    %v1116 = vadd.f32 %v1114, %v516
    %v1117 = vxor.u32 %v1115, 2147483648
    %v1118 = vxor.u32 %v1116, 2147483648
    %v1119 = vmul.f32 %v1117, 1.442695
    %v1120 = vpow.pop %v1119
    %v1121 = vmul.f32 %v1118, 1.442695
    %v1122 = vpow.pop %v1121
    %v1123 = vadd.f32 %v1120, 1.0
    %v1124 = vadd.f32 %v1122, 1.0
    %v1125 = vrcp.pop %v1123
    %v1126 = vmul.f32 1.0, %v1125
    %v1127 = vrcp.pop %v1124
    %v1128 = vmul.f32 1.0, %v1127
    %v1129 = vadd.f32 %v1066, %v101
    %v1130 = vadd.f32 %v1109, %v102
    %v1131 = vmul.f32 %v1126, %v1130
    %v1132 = vadd.f32 %v1129, %v1131
    %v1133 = vtanh.pop %v1132
    %v1134 = vsub.f32 1.0, %v1128
    %v1135 = vmul.f32 %v1134, %v1133
    %v1136 = vmul.f32 %v1128, %v988
    %v1137 = vadd.f32 %v1135, %v1136
    %v1138 = vpack.c.bf16 %v1137, %v1137
    %v1139 = vld [vmem:[%s7] sm:$0xf]
    %v1140 = vld [vmem:[%s7 + $0x4] sm:$0xf]
    %v1141 = vld [vmem:[%s7 + $0x8] sm:$0xf]
    %v1142 = vld [vmem:[%s7 + $0xc] sm:$0xf]
    %v1143 = vld [vmem:[%s7 + $0x10] sm:$0xf]
    %v1144 = vld [vmem:[%s7 + $0x14] sm:$0xf]
    %v1145 = vld [vmem:[%s7 + $0x18] sm:$0xf]
    %v1146 = vld [vmem:[%s7 + $0x1c] sm:$0xf]
    %v1147 = vld [vmem:[%s7 + $0x20] sm:$0xf]
    %v1148 = vld [vmem:[%s7 + $0x24] sm:$0xf]
    %v1149 = vld [vmem:[%s7 + $0x28] sm:$0xf]
    %v1150 = vld [vmem:[%s7 + $0x2c] sm:$0xf]
    %v1151 = vld [vmem:[%s7 + $0x30] sm:$0xf]
    %v1152 = vld [vmem:[%s7 + $0x34] sm:$0xf]
    %v1153 = vld [vmem:[%s7 + $0x38] sm:$0xf]
    %v1154 = vld [vmem:[%s7 + $0x3c] sm:$0xf]
    %v1155 = vld [vmem:[%s8] sm:$0x1]
    %v1172 = vunpack.c.l.b16 %v1139
    %v1173 = vunpack.c.l.b16 %v1140
    %v1174 = vunpack.c.l.b16 %v1141
    %v1175 = vunpack.c.l.b16 %v1142
    %v1176 = vunpack.c.l.b16 %v1143
    %v1177 = vunpack.c.l.b16 %v1144
    %v1178 = vunpack.c.l.b16 %v1145
    %v1179 = vunpack.c.l.b16 %v1146
    %v1180 = vunpack.c.l.b16 %v1147
    %v1181 = vunpack.c.l.b16 %v1148
    %v1182 = vunpack.c.l.b16 %v1149
    %v1183 = vunpack.c.l.b16 %v1150
    %v1184 = vunpack.c.l.b16 %v1151
    %v1185 = vunpack.c.l.b16 %v1152
    %v1186 = vunpack.c.l.b16 %v1153
    %v1187 = vunpack.c.l.b16 %v1154
    %v1188 = vpack.c.b16 %v1173, %v1172
    %v1189 = vpack.c.b16 %v1175, %v1174
    %v1190 = vpack.c.b16 %v1177, %v1176
    %v1191 = vpack.c.b16 %v1179, %v1178
    %v1192 = vpack.c.b16 %v1181, %v1180
    %v1193 = vpack.c.b16 %v1183, %v1182
    %v1194 = vpack.c.b16 %v1185, %v1184
    %v1195 = vpack.c.b16 %v1187, %v1186
    %1204 = vmatprep.subr.bf16.mxu0 0
    %1205 = vmatpush1.bf16.msra.mxu0 %v1188
    %1206 = vmatprep.subr.bf16.mxu0 0
    %1207 = vmatpush1.bf16.msra.mxu0 %v1189
    %1208 = vmatprep.subr.bf16.mxu0 0
    %1209 = vmatpush1.bf16.msra.mxu0 %v1190
    %1210 = vmatprep.subr.bf16.mxu0 0
    %1211 = vmatpush1.bf16.msra.mxu0 %v1191
    %1212 = vmatprep.subr.bf16.mxu0 0
    %1213 = vmatpush1.bf16.msra.mxu0 %v1192
    %1214 = vmatprep.subr.bf16.mxu0 0
    %1215 = vmatpush1.bf16.msra.mxu0 %v1193
    %1216 = vmatprep.subr.bf16.mxu0 0
    %1217 = vmatpush1.bf16.msra.mxu0 %v1194
    %1218 = vmatprep.subr.bf16.mxu0 0
    %1219 = vmatpush1.bf16.msra.mxu0 %v1195
    %1220 = vmatprep.subr.bf16.mxu0 0
    %1221 = vmatpush1.bf16.msra.mxu0 0
    %1222 = vmatprep.subr.bf16.mxu0 0
    %1223 = vmatpush1.bf16.msra.mxu0 0
    %1224 = vmatprep.subr.bf16.mxu0 0
    %1225 = vmatpush1.bf16.msra.mxu0 0
    %1226 = vmatprep.subr.bf16.mxu0 0
    %1227 = vmatpush1.bf16.msra.mxu0 0
    %1228 = vmatprep.subr.bf16.mxu0 0
    %1229 = vmatpush1.bf16.msra.mxu0 0
    %1230 = vmatprep.subr.bf16.mxu0 0
    %1231 = vmatpush1.bf16.msra.mxu0 0
    %1232 = vmatprep.subr.bf16.mxu0 0
    %1233 = vmatpush1.bf16.msra.mxu0 0
    %1234 = vmatprep.subr.bf16.mxu0 0
    %1235 = vmatpush1.bf16.msra.mxu0 0
    %1236 = vmatprep.mubr.bf16.mxu0 0
    %1237 = vmatmul.mubr.bf16.gmra.mrb[0].mxu0 %v1138
    %v1238 = vpop.f32.mrb[0].mxu0
    %v1239 = vadd.f32 %v1155, %v1238
    %v1240 = vpop.f32.mrb[0].mxu0
    %v1241 = vpop.f32.mrb[0].mxu0
    %v1242 = vpop.f32.mrb[0].mxu0
    %1243 = vdwg.mxu0
    %vm1244 = vcmask 1040384
    %v1245 = vsel %vm1244, %v1239, -inf
    %1246 = vmax.xlane.f32.xlu0 %v1245
    %v1247 = vpop.xlane.xlu0 %1246
    %v1248 = vsub.f32 %v1239, %v1247
    %v1249 = vmul.f32 %v1248, 1.442695
    %v1250 = vpow.pop %v1249
    %v1251 = vsel %vm1244, %v1250, 0.0
    %1252 = vadd.xlane.f32.xlu0 %v1251
    %v1253 = vpop.xlane.xlu0 %1252
    %v1254 = vlog2.pop %v1253
    %v1255 = vmul.f32 %v1254, 0.6931472
    %v1256 = vadd.f32 %v1247, %v1255
    %v1257 = vsub.f32 %v1239, %v1256
    %1258 = vst [vmem:[#allocation4] sm:$0x1] %v1257
    %1259 = vst [vmem:[%s10] sm:$0x1] %v1137
    // Predicated region
    $region34: #{decoder_rnn_forward.1} parent=1 // pred_check
      _
    $region35: #{decoder_rnn_forward.1} parent=1 // pred_check_branch
      %1261 = sbr.rel (0) target = $region37
    $region36: #{decoder_rnn_forward.1} parent=1 // pred_region
      %s1263 = ssub.s32 16, 16
      %1264 = vsyncadd [#allocation5], %s1263
      %s1266 = sshll.u32 [#allocation4], 4
      %s1267 = int_to_ptr.vmem [resolvable:$true] %s1266
      %1269 = dma.vmem_to_hbm [thread:$0]  %s1267, 16, %s9, [#allocation5]
    $region37: #{decoder_rnn_forward.1} parent=1 // pred_fallthru
      _
    // Predicated region
    $region38: #{decoder_rnn_forward.1} parent=1 // pred_check
      _
    $region39: #{decoder_rnn_forward.1} parent=1 // pred_check_branch
      %1271 = sbr.rel (0) target = $region41
    $region40: #{decoder_rnn_forward.1} parent=1 // pred_region
      _
    $region41: #{decoder_rnn_forward.1} parent=1 // pred_fallthru
      _
    // Predicated region
    $region42: #{decoder_rnn_forward.1} parent=1 // pred_check
      _
    $region43: #{decoder_rnn_forward.1} parent=1 // pred_check_branch
      %1273 = sbr.rel (0) target = $region45
    $region44: #{decoder_rnn_forward.1} parent=1 // pred_region
      %1274 = dma.done [#allocation5], 16
    $region45: #{decoder_rnn_forward.1} parent=1 // pred_fallthru
      _
    // Predicated region
    $region46: #{decoder_rnn_forward.1} parent=1 // pred_check
      _
    $region47: #{decoder_rnn_forward.1} parent=1 // pred_check_branch
      %1276 = sbr.rel (0) target = $region49
    $region48: #{decoder_rnn_forward.1} parent=1 // pred_region
      _
    $region49: #{decoder_rnn_forward.1} parent=1 // pred_fallthru
      _
    %1277 = vsyncpa [#allocation5], 1

</llo_original>
